<compile_context>
chip_gen: v7x
topology: tpu7x:2x2x1
jax: 0.10.0
libtpu: 0.0.40
codegen_flags: <defaults>
</compile_context>

<pallas_src>
import numpy as np
from functools import partial

import jax
import jax.numpy as jnp
from jax.experimental import pallas as pl
from jax.experimental.pallas import tpu as pltpu


# ----------------------------- group helpers (plain python) -----------------------------

def groupsize(g):
    return 2 ** max(sum(g), 0)


def subgroupsize(g, i):
    return 2 ** max(g[i], 0)


def rot_n(x, r, n):
    # mirrors rotate_n for the C4-compatible cases (the only ones reachable for group=(0,2))
    if r == 0:
        return x
    if r / n == 1 / 2:
        return jnp.rot90(x, 2, axes=(-2, -1))
    if r / n == 1 / 4:
        return jnp.rot90(x, 1, axes=(-2, -1))
    if r / n == 3 / 4:
        return jnp.rot90(x, 3, axes=(-2, -1))
    # TODO(synk): arbitrary-angle tvF.rotate branch has no Pallas/JAX equivalent here
    #             (never reached for group=(0,2) / D4 subgroups).
    raise NotImplementedError


# ----------------------------- Pallas kernel -----------------------------

def _mixed_conv_kernel(xpf_ref, w_ref, b_ref, o_ref, *, offsets, Q, Ho, Wo, Wp):
    """Fused im2col + folded-mixture conv for one image.

    xpf_ref : (1, Cin, P)       bf16   padded image, flattened spatial (P = Hp*Wp)
    w_ref   : (K*K, Cout, Cin)  bf16   folded filter taps, VMEM-resident
    b_ref   : (Cout, 1)         f32    folded bias, VMEM-resident
    o_ref   : (1, Cout, Ho*Wo)  f32    lane-dense NCHW-flat output block
    """
    x = xpf_ref[0]                                               # (Cin, P)
    # K*K shifted MXU dots, f32 accumulation (computed over the padded width Wp).
    acc = jnp.dot(w_ref[0], x[:, offsets[0]:offsets[0] + Q],
                  preferred_element_type=jnp.float32)            # (Cout, Q)
    for i in range(1, len(offsets)):
        d = offsets[i]
        acc = acc + jnp.dot(w_ref[i], x[:, d:d + Q],
                            preferred_element_type=jnp.float32)
    acc = acc + b_ref[...]                                       # (Cout, 1) broadcast
    # Drop the padded-width garbage columns (w' >= Wo of each row) in-registers, then one
    # dense store; this compaction is VMEM/vreg-local (no extra HBM pass).
    rows = [acc[:, h * Wp: h * Wp + Wo] for h in range(Ho)]
    o_ref[0] = jnp.concatenate(rows, axis=-1)                    # (Cout, Ho*Wo)


def mixed_lifting_conv2d_pallas(x_nchw, filters, biases_full, alphas, padding, stride=1):
    """x_nchw: (N, Cin, H, W); filters: list of (Cout, Cin, K, K); biases_full: list of (Cout,)."""
    N, Cin, H, W = x_nchw.shape
    Cout, _, K, _ = filters[0].shape
    assert stride == 1, "kernel implements the module's stride=1 path"
    Ho, Wo = H + 2 * padding - K + 1, W + 2 * padding - K + 1
    # forward() accumulates into a zeros(N, Cout, H, W) buffer -> 'same' conv is required.
    assert (Ho, Wo) == (H, W), "MixedLiftingConv2d.forward requires padding == (K-1)//2"

    # ---- fold the softmax mixture into one weight / bias (exact by linearity) ----
    a = alphas.astype(jnp.float32)
    f_stack = jnp.stack(filters).astype(jnp.float32)              # (L, Cout, Cin, K, K)
    b_stack = jnp.stack(biases_full).astype(jnp.float32)          # (L, Cout)
    w_mix = jnp.tensordot(a, f_stack, axes=1)                     # (Cout, Cin, K, K) f32
    b_mix = jnp.tensordot(a, b_stack, axes=1).reshape(Cout, 1)    # (Cout, 1)         f32
    # per-(kh,kw) tap matrices; bf16 halves HBM/VMEM traffic (documented f32->bf16 deviation)
    w_taps = jnp.transpose(w_mix, (2, 3, 0, 1)).reshape(K * K, Cout, Cin).astype(jnp.bfloat16)

    # ---- zero-pad x once, in bf16 BEFORE padding (halves the only prologue pass) ----
    # one extra bottom row keeps every shifted flat window d : d+Q in bounds.
    Wp, Hp = W + 2 * padding, H + 2 * padding + 1
    xp = jnp.pad(x_nchw.astype(jnp.bfloat16),
                 ((0, 0), (0, 0), (padding, padding + 1), (padding, padding)))
    P = Hp * Wp
    xpf = xp.reshape(N, Cin, P)                                   # flat padded spatial
    Q = Ho * Wp                                                   # output rows over padded width
    HW = Ho * Wo
    offsets = tuple(kh * Wp + kw for kh in range(K) for kw in range(K))

    kernel = partial(_mixed_conv_kernel, offsets=offsets, Q=Q, Ho=Ho, Wo=Wo, Wp=Wp)

    out_flat = pl.pallas_call(
        kernel,
        out_shape=jax.ShapeDtypeStruct((N, Cout, HW), jnp.float32),
        grid=(N,),                                                # one image per step; >=2 steps for v7x
        in_specs=[
            pl.BlockSpec((1, Cin, P), lambda n: (n, 0, 0)),       # streamed + auto double-buffered
            pl.BlockSpec((K * K, Cout, Cin), lambda n: (0, 0, 0)),  # resident
            pl.BlockSpec((Cout, 1), lambda n: (0, 0)),            # resident
        ],
        out_specs=pl.BlockSpec((1, Cout, HW), lambda n: (n, 0, 0)),  # lane-dense output block
        compiler_params=pltpu.CompilerParams(
            dimension_semantics=("parallel",),                    # shard images across TCs on v7x
            vmem_limit_bytes=32 * 1024 * 1024,                    # safe on v5e/v6e/v7x
        ),
    )(xpf, w_taps, b_mix)

    return out_flat.reshape(N, Cout, Ho, Wo)                      # free reshape (no transpose pass)


# ----------------------------- parameter setup (mirrors __init__) -----------------------------

def build_params(key, group, in_channels, out_channels_base, K):
    C_out_total = out_channels_base * groupsize(group)
    n_layers = int(np.prod([g + 1 for g in group]))
    # defaults: prior=True, discrete=False, baseline=False, skip=False
    alpha_logits = np.zeros(n_layers + 1, dtype=np.float32)
    alpha_logits[:-2] = -2.0
    alpha_logits[-1] = -np.inf
    weights, biases, groups_list = [], [], []
    for i in range(group[0] + 1):
        for j in range(group[1] + 1):
            g = (i, j)
            out_c = C_out_total // groupsize(g)
            key, k1, k2 = jax.random.split(key, 3)
            std = 1.0 / np.sqrt(out_c * in_channels)
            w = std * jax.random.normal(k1, (out_c, in_channels, K, K), jnp.float32)
            # module inits bias to zeros; use small deterministic values to exercise the bias path
            b = 0.1 * jax.random.normal(k2, (out_c,), jnp.float32)
            weights.append(w)
            biases.append(b)
            groups_list.append(g)
    norms = [jnp.linalg.norm(w) for w in weights]
    return alpha_logits, weights, biases, norms, groups_list, C_out_total


def build_filters(group, groups_list, weights, biases, norms, C_out_total, in_channels, K):
    """Mirrors the per-layer _filter / _bias construction in forward() for group=(0,2)."""
    filters, biases_full = [], []
    for layer, g in enumerate(groups_list):
        # norm=True rescale (identity at init, kept for fidelity)
        w = weights[layer] / jnp.linalg.norm(weights[layer]) * norms[layer]
        assert g[0] == 0, "group=(0,2): rotation-only branch"
        n_rot = subgroupsize(g, 1)
        gs = groupsize(g)
        rots = [rot_n(w, r, gs) for r in range(n_rot)]
        filt = jnp.stack(rots, axis=1).reshape(C_out_total, in_channels, K, K)
        # output channel reorder (only the filter gets reordered; bias does not -- matches PyTorch)
        if group == (0, 2) and g != (0, 2):
            order = sum([[4 * c, 4 * c + 2, 4 * c + 1, 4 * c + 3] for c in range(C_out_total // 4)], [])
        else:
            order = list(range(C_out_total))
        filt = filt[np.array(order)]
        bias_full = jnp.repeat(biases[layer], gs)   # stack([b]*gs, dim=1).reshape == repeat_interleave
        filters.append(filt)
        biases_full.append(bias_full)
    return filters, biases_full


# ----------------------------- main -----------------------------

if __name__ == "__main__":
    group = (0, 2)
    in_channels, out_channels_base, K, padding = 4, 4, 3, 1
    N, H, W = 2, 16, 16

    key = jax.random.PRNGKey(0)
    key, kx = jax.random.split(key)
    x = jax.random.normal(kx, (N, in_channels, H, W), jnp.float32)

    alpha_logits, weights, biases, norms, groups_list, C_out_total = build_params(
        key, group, in_channels, out_channels_base, K
    )
    alphas = jax.nn.softmax(jnp.asarray(alpha_logits))   # [-2, -2, 0, -inf] -> skip weight is 0

    filters, biases_full = build_filters(
        group, groups_list, weights, biases, norms, C_out_total, in_channels, K
    )

    # forward(): skip alpha is 0 (and in != out channels) -> out starts from zeros; all
    # finite-logit conv layers are active.  (An active skip branch would be a plain JAX
    # alphas[-1] * jnp.tile(x, ...) add outside the kernel -- not exercised here.)
    active = list(range(len(groups_list)))
    out = mixed_lifting_conv2d_pallas(
        x,
        [filters[l] for l in active],
        [biases_full[l] for l in active],
        alphas[jnp.array(active)],
        padding,
    )
    out = jax.block_until_ready(out)

    # pure-JAX f32 reference for sanity (kernel uses bf16 inputs with f32 accumulation)
    ref = jnp.zeros_like(out)
    for l in active:
        y = jax.lax.conv_general_dilated(
            x, filters[l], (1, 1), ((padding, padding), (padding, padding)),
            dimension_numbers=("NCHW", "OIHW", "NCHW"),
            precision=jax.lax.Precision.HIGHEST,
        )
        y = y + biases_full[l][None, :, None, None]
        ref = ref + alphas[l] * y

    err = float(np.max(np.abs(np.asarray(out) - np.asarray(ref))))
    assert np.allclose(np.asarray(out), np.asarray(ref), rtol=2e-2, atol=3e-2), f"max abs err {err}"
    print("KERNEL_OK")
</pallas_src>

<mosaic_0001>
module attributes {stable_mosaic.version = 11 : i64} {
  func.func @_mixed_conv_kernel(%arg0: i32, %arg1: memref<1x4x342xbf16, #tpu.memory_space<vmem>>, %arg2: memref<9x16x4xbf16, #tpu.memory_space<vmem>>, %arg3: memref<16x1xf32, #tpu.memory_space<vmem>>, %arg4: memref<1x16x256xf32, #tpu.memory_space<vmem>>) attributes {dimension_semantics = [#tpu.dimension_semantics<parallel>], iteration_bounds = array<i64: 2>, scalar_prefetch = 0 : i64, scratch_operands = 0 : i64, tpu.core_type = #tpu.core_type<tc>, window_params = [{transform_indices = @transform_0, window_bounds = array<i64: 1, 4, 342>}, {pipeline_mode = #tpu.pipeline_mode<synchronous>, transform_indices = @transform_1, window_bounds = array<i64: 9, 16, 4>}, {pipeline_mode = #tpu.pipeline_mode<synchronous>, transform_indices = @transform_2, window_bounds = array<i64: 16, 1>}, {transform_indices = @transform_3, window_bounds = array<i64: 1, 16, 256>}]} {
    %c0 = arith.constant 0 : index
    %c0_0 = arith.constant 0 : index
    %c0_1 = arith.constant 0 : index
    %0 = vector.load %arg1[%c0, %c0_0, %c0_1] : memref<1x4x342xbf16, #tpu.memory_space<vmem>>, vector<1x4x342xbf16>
    %1 = vector.shape_cast %0 : vector<1x4x342xbf16> to vector<4x342xbf16>
    %c0_2 = arith.constant 0 : index
    %c0_3 = arith.constant 0 : index
    %c0_4 = arith.constant 0 : index
    %2 = vector.load %arg2[%c0_2, %c0_3, %c0_4] : memref<9x16x4xbf16, #tpu.memory_space<vmem>>, vector<1x16x4xbf16>
    %3 = vector.shape_cast %2 : vector<1x16x4xbf16> to vector<16x4xbf16>
    %4 = vector.extract_strided_slice %1 {offsets = [0, 0], sizes = [4, 288], strides = [1, 1]} : vector<4x342xbf16> to vector<4x288xbf16>
    %cst = arith.constant dense<0.000000e+00> : vector<16x288xf32>
    %5 = tpu.matmul %3, %4, %cst {dimension_numbers = #tpu.dot_dimension_numbers<[1], [0], [0], [1], [0, 0, 1, 1], [], []>} : vector<16x4xbf16>, vector<4x288xbf16>, vector<16x288xf32> -> vector<16x288xf32>
    %c1 = arith.constant 1 : index
    %c0_5 = arith.constant 0 : index
    %c0_6 = arith.constant 0 : index
    %6 = vector.load %arg2[%c1, %c0_5, %c0_6] : memref<9x16x4xbf16, #tpu.memory_space<vmem>>, vector<1x16x4xbf16>
    %7 = vector.shape_cast %6 : vector<1x16x4xbf16> to vector<16x4xbf16>
    %8 = vector.extract_strided_slice %1 {offsets = [0, 1], sizes = [4, 288], strides = [1, 1]} : vector<4x342xbf16> to vector<4x288xbf16>
    %cst_7 = arith.constant dense<0.000000e+00> : vector<16x288xf32>
    %9 = tpu.matmul %7, %8, %cst_7 {dimension_numbers = #tpu.dot_dimension_numbers<[1], [0], [0], [1], [0, 0, 1, 1], [], []>} : vector<16x4xbf16>, vector<4x288xbf16>, vector<16x288xf32> -> vector<16x288xf32>
    %10 = arith.addf %5, %9 : vector<16x288xf32>
    %c2 = arith.constant 2 : index
    %c0_8 = arith.constant 0 : index
    %c0_9 = arith.constant 0 : index
    %11 = vector.load %arg2[%c2, %c0_8, %c0_9] : memref<9x16x4xbf16, #tpu.memory_space<vmem>>, vector<1x16x4xbf16>
    %12 = vector.shape_cast %11 : vector<1x16x4xbf16> to vector<16x4xbf16>
    %13 = vector.extract_strided_slice %1 {offsets = [0, 2], sizes = [4, 288], strides = [1, 1]} : vector<4x342xbf16> to vector<4x288xbf16>
    %cst_10 = arith.constant dense<0.000000e+00> : vector<16x288xf32>
    %14 = tpu.matmul %12, %13, %cst_10 {dimension_numbers = #tpu.dot_dimension_numbers<[1], [0], [0], [1], [0, 0, 1, 1], [], []>} : vector<16x4xbf16>, vector<4x288xbf16>, vector<16x288xf32> -> vector<16x288xf32>
    %15 = arith.addf %10, %14 : vector<16x288xf32>
    %c3 = arith.constant 3 : index
    %c0_11 = arith.constant 0 : index
    %c0_12 = arith.constant 0 : index
    %16 = vector.load %arg2[%c3, %c0_11, %c0_12] : memref<9x16x4xbf16, #tpu.memory_space<vmem>>, vector<1x16x4xbf16>
    %17 = vector.shape_cast %16 : vector<1x16x4xbf16> to vector<16x4xbf16>
    %18 = vector.extract_strided_slice %1 {offsets = [0, 18], sizes = [4, 288], strides = [1, 1]} : vector<4x342xbf16> to vector<4x288xbf16>
    %cst_13 = arith.constant dense<0.000000e+00> : vector<16x288xf32>
    %19 = tpu.matmul %17, %18, %cst_13 {dimension_numbers = #tpu.dot_dimension_numbers<[1], [0], [0], [1], [0, 0, 1, 1], [], []>} : vector<16x4xbf16>, vector<4x288xbf16>, vector<16x288xf32> -> vector<16x288xf32>
    %20 = arith.addf %15, %19 : vector<16x288xf32>
    %c4 = arith.constant 4 : index
    %c0_14 = arith.constant 0 : index
    %c0_15 = arith.constant 0 : index
    %21 = vector.load %arg2[%c4, %c0_14, %c0_15] : memref<9x16x4xbf16, #tpu.memory_space<vmem>>, vector<1x16x4xbf16>
    %22 = vector.shape_cast %21 : vector<1x16x4xbf16> to vector<16x4xbf16>
    %23 = vector.extract_strided_slice %1 {offsets = [0, 19], sizes = [4, 288], strides = [1, 1]} : vector<4x342xbf16> to vector<4x288xbf16>
    %cst_16 = arith.constant dense<0.000000e+00> : vector<16x288xf32>
    %24 = tpu.matmul %22, %23, %cst_16 {dimension_numbers = #tpu.dot_dimension_numbers<[1], [0], [0], [1], [0, 0, 1, 1], [], []>} : vector<16x4xbf16>, vector<4x288xbf16>, vector<16x288xf32> -> vector<16x288xf32>
    %25 = arith.addf %20, %24 : vector<16x288xf32>
    %c5 = arith.constant 5 : index
    %c0_17 = arith.constant 0 : index
    %c0_18 = arith.constant 0 : index
    %26 = vector.load %arg2[%c5, %c0_17, %c0_18] : memref<9x16x4xbf16, #tpu.memory_space<vmem>>, vector<1x16x4xbf16>
    %27 = vector.shape_cast %26 : vector<1x16x4xbf16> to vector<16x4xbf16>
    %28 = vector.extract_strided_slice %1 {offsets = [0, 20], sizes = [4, 288], strides = [1, 1]} : vector<4x342xbf16> to vector<4x288xbf16>
    %cst_19 = arith.constant dense<0.000000e+00> : vector<16x288xf32>
    %29 = tpu.matmul %27, %28, %cst_19 {dimension_numbers = #tpu.dot_dimension_numbers<[1], [0], [0], [1], [0, 0, 1, 1], [], []>} : vector<16x4xbf16>, vector<4x288xbf16>, vector<16x288xf32> -> vector<16x288xf32>
    %30 = arith.addf %25, %29 : vector<16x288xf32>
    %c6 = arith.constant 6 : index
    %c0_20 = arith.constant 0 : index
    %c0_21 = arith.constant 0 : index
    %31 = vector.load %arg2[%c6, %c0_20, %c0_21] : memref<9x16x4xbf16, #tpu.memory_space<vmem>>, vector<1x16x4xbf16>
    %32 = vector.shape_cast %31 : vector<1x16x4xbf16> to vector<16x4xbf16>
    %33 = vector.extract_strided_slice %1 {offsets = [0, 36], sizes = [4, 288], strides = [1, 1]} : vector<4x342xbf16> to vector<4x288xbf16>
    %cst_22 = arith.constant dense<0.000000e+00> : vector<16x288xf32>
    %34 = tpu.matmul %32, %33, %cst_22 {dimension_numbers = #tpu.dot_dimension_numbers<[1], [0], [0], [1], [0, 0, 1, 1], [], []>} : vector<16x4xbf16>, vector<4x288xbf16>, vector<16x288xf32> -> vector<16x288xf32>
    %35 = arith.addf %30, %34 : vector<16x288xf32>
    %c7 = arith.constant 7 : index
    %c0_23 = arith.constant 0 : index
    %c0_24 = arith.constant 0 : index
    %36 = vector.load %arg2[%c7, %c0_23, %c0_24] : memref<9x16x4xbf16, #tpu.memory_space<vmem>>, vector<1x16x4xbf16>
    %37 = vector.shape_cast %36 : vector<1x16x4xbf16> to vector<16x4xbf16>
    %38 = vector.extract_strided_slice %1 {offsets = [0, 37], sizes = [4, 288], strides = [1, 1]} : vector<4x342xbf16> to vector<4x288xbf16>
    %cst_25 = arith.constant dense<0.000000e+00> : vector<16x288xf32>
    %39 = tpu.matmul %37, %38, %cst_25 {dimension_numbers = #tpu.dot_dimension_numbers<[1], [0], [0], [1], [0, 0, 1, 1], [], []>} : vector<16x4xbf16>, vector<4x288xbf16>, vector<16x288xf32> -> vector<16x288xf32>
    %40 = arith.addf %35, %39 : vector<16x288xf32>
    %c8 = arith.constant 8 : index
    %c0_26 = arith.constant 0 : index
    %c0_27 = arith.constant 0 : index
    %41 = vector.load %arg2[%c8, %c0_26, %c0_27] : memref<9x16x4xbf16, #tpu.memory_space<vmem>>, vector<1x16x4xbf16>
    %42 = vector.shape_cast %41 : vector<1x16x4xbf16> to vector<16x4xbf16>
    %43 = vector.extract_strided_slice %1 {offsets = [0, 38], sizes = [4, 288], strides = [1, 1]} : vector<4x342xbf16> to vector<4x288xbf16>
    %cst_28 = arith.constant dense<0.000000e+00> : vector<16x288xf32>
    %44 = tpu.matmul %42, %43, %cst_28 {dimension_numbers = #tpu.dot_dimension_numbers<[1], [0], [0], [1], [0, 0, 1, 1], [], []>} : vector<16x4xbf16>, vector<4x288xbf16>, vector<16x288xf32> -> vector<16x288xf32>
    %45 = arith.addf %40, %44 : vector<16x288xf32>
    %c0_29 = arith.constant 0 : index
    %c0_30 = arith.constant 0 : index
    %46 = vector.load %arg3[%c0_29, %c0_30] : memref<16x1xf32, #tpu.memory_space<vmem>>, vector<16x1xf32>
    %47 = vector.broadcast %46 : vector<16x1xf32> to vector<16x288xf32>
    %48 = arith.addf %45, %47 : vector<16x288xf32>
    %49 = vector.extract_strided_slice %48 {offsets = [0, 0], sizes = [16, 16], strides = [1, 1]} : vector<16x288xf32> to vector<16x16xf32>
    %50 = vector.extract_strided_slice %48 {offsets = [0, 18], sizes = [16, 16], strides = [1, 1]} : vector<16x288xf32> to vector<16x16xf32>
    %51 = vector.extract_strided_slice %48 {offsets = [0, 36], sizes = [16, 16], strides = [1, 1]} : vector<16x288xf32> to vector<16x16xf32>
    %52 = vector.extract_strided_slice %48 {offsets = [0, 54], sizes = [16, 16], strides = [1, 1]} : vector<16x288xf32> to vector<16x16xf32>
    %53 = vector.extract_strided_slice %48 {offsets = [0, 72], sizes = [16, 16], strides = [1, 1]} : vector<16x288xf32> to vector<16x16xf32>
    %54 = vector.extract_strided_slice %48 {offsets = [0, 90], sizes = [16, 16], strides = [1, 1]} : vector<16x288xf32> to vector<16x16xf32>
    %55 = vector.extract_strided_slice %48 {offsets = [0, 108], sizes = [16, 16], strides = [1, 1]} : vector<16x288xf32> to vector<16x16xf32>
    %56 = vector.extract_strided_slice %48 {offsets = [0, 126], sizes = [16, 16], strides = [1, 1]} : vector<16x288xf32> to vector<16x16xf32>
    %57 = vector.extract_strided_slice %48 {offsets = [0, 144], sizes = [16, 16], strides = [1, 1]} : vector<16x288xf32> to vector<16x16xf32>
    %58 = vector.extract_strided_slice %48 {offsets = [0, 162], sizes = [16, 16], strides = [1, 1]} : vector<16x288xf32> to vector<16x16xf32>
    %59 = vector.extract_strided_slice %48 {offsets = [0, 180], sizes = [16, 16], strides = [1, 1]} : vector<16x288xf32> to vector<16x16xf32>
    %60 = vector.extract_strided_slice %48 {offsets = [0, 198], sizes = [16, 16], strides = [1, 1]} : vector<16x288xf32> to vector<16x16xf32>
    %61 = vector.extract_strided_slice %48 {offsets = [0, 216], sizes = [16, 16], strides = [1, 1]} : vector<16x288xf32> to vector<16x16xf32>
    %62 = vector.extract_strided_slice %48 {offsets = [0, 234], sizes = [16, 16], strides = [1, 1]} : vector<16x288xf32> to vector<16x16xf32>
    %63 = vector.extract_strided_slice %48 {offsets = [0, 252], sizes = [16, 16], strides = [1, 1]} : vector<16x288xf32> to vector<16x16xf32>
    %64 = vector.extract_strided_slice %48 {offsets = [0, 270], sizes = [16, 16], strides = [1, 1]} : vector<16x288xf32> to vector<16x16xf32>
    %65 = tpu.concatenate %49, %50, %51, %52, %53, %54, %55, %56, %57, %58, %59, %60, %61, %62, %63, %64 in 1 : vector<16x16xf32>, vector<16x16xf32>, vector<16x16xf32>, vector<16x16xf32>, vector<16x16xf32>, vector<16x16xf32>, vector<16x16xf32>, vector<16x16xf32>, vector<16x16xf32>, vector<16x16xf32>, vector<16x16xf32>, vector<16x16xf32>, vector<16x16xf32>, vector<16x16xf32>, vector<16x16xf32>, vector<16x16xf32> -> vector<16x256xf32>
    %c0_31 = arith.constant 0 : index
    %c0_32 = arith.constant 0 : index
    %c0_33 = arith.constant 0 : index
    %66 = vector.load %arg4[%c0_31, %c0_32, %c0_33] : memref<1x16x256xf32, #tpu.memory_space<vmem>>, vector<1x16x256xf32>
    %67 = vector.shape_cast %66 : vector<1x16x256xf32> to vector<16x256xf32>
    %68 = vector.shape_cast %65 : vector<16x256xf32> to vector<1x16x256xf32>
    tpu.vector_store %arg4[%c0_31, %c0_32, %c0_33], %68 {strides = array<i32>} : memref<1x16x256xf32, #tpu.memory_space<vmem>>, vector<1x16x256xf32>,
    return
  }
  func.func @transform_0(%arg0: i32) -> (i32, i32, i32) {
    %c0_i32 = arith.constant 0 : i32
    %c0_i32_0 = arith.constant 0 : i32
    %c0_i32_1 = arith.constant 0 : i32
    return %arg0, %c0_i32, %c0_i32_0 : i32, i32, i32
  }
  func.func @transform_1(%arg0: i32) -> (i32, i32, i32) {
    %c0_i32 = arith.constant 0 : i32
    %c0_i32_0 = arith.constant 0 : i32
    %c0_i32_1 = arith.constant 0 : i32
    %c0_i32_2 = arith.constant 0 : i32
    return %c0_i32, %c0_i32_0, %c0_i32_1 : i32, i32, i32
  }
  func.func @transform_2(%arg0: i32) -> (i32, i32) {
    %c0_i32 = arith.constant 0 : i32
    %c0_i32_0 = arith.constant 0 : i32
    %c0_i32_1 = arith.constant 0 : i32
    return %c0_i32, %c0_i32_0 : i32, i32
  }
  func.func @transform_3(%arg0: i32) -> (i32, i32, i32) {
    %c0_i32 = arith.constant 0 : i32
    %c0_i32_0 = arith.constant 0 : i32
    %c0_i32_1 = arith.constant 0 : i32
    return %arg0, %c0_i32, %c0_i32_0 : i32, i32, i32
  }
}

</mosaic_0001>

<llo_original>
// kernel: tpu_custom_call.1
$region0: #{tpu_custom_call.1}
  #allocation0 [shape = 'u32[]', space=smem, size = 0x4, offset = 0x4, fixed_abs, tag = 'smem constant byte address 0x4 - core index']
  #allocation1 [shape = 'u32[144,128]{1,0:T(1,128)}', space=vmem, size = 0x12000, scoped, tag = 'internal scratch']
  %s0 = inlined_call_operand.vmem [shape: bf16[2,4,342], index: 0, kind: input, shape index: {}]
  %s1 = inlined_call_operand.vmem [shape: bf16[9,16,4], index: 1, kind: input, shape index: {}]
  %s2 = inlined_call_operand.vmem [shape: f32[16,1], index: 2, kind: input, shape index: {}]
  %s3 = inlined_call_operand.hbm [shape: f32[2,16,256], index: 3, kind: output, shape index: {}]
  %s4 = sld [smem:[#allocation0]]
  $region45: #{tpu_custom_call.1} parent=0
    _
  %s6 = ssub.s32 1, %s4
  %s7 = scalar_select 0, %s6, %s4
  $region1: #{tpu_custom_call.1} parent=0
    #allocation2 [shape = 'u8[32768]{0}', space=vmem, size = 0x8000, scoped, tag = 'output window, operand 0']
    #allocation3 [shape = 's32[2]{0}', space=sflag, size = 0x8, scoped, tag = 'scoped memory for tpu_custom_call.1']
    %8 = vsyncpa [#allocation3], 0
    %s9 = scalar_lea.sflag [#allocation3], 1
    %10 = vsyncpa %s9, 0
    loop: start=0, step=1, limit=4
    $region2: #{tpu_custom_call.1} parent=1 // loop_pre_header
      _
    $region3: #{tpu_custom_call.1} parent=1 // loop_header
      %s12 = sphi 0, %s16
      %p13 = scmp.ge.s32.totalorder %s12, 4
      %s22 = sphi 0, %s24
      %s25 = sphi 0, %s22
      %s26 = sphi 0, %s25
      %s42 = sphi 0, %s26
      %s46 = sphi 0, %s46
      %s48 = sphi 0, %s46
      %s49 = sphi 0, %s48
      %s63 = sphi 0, %s49
      %s67 = sphi 0, %s67
      %s69 = sphi 0, %s67
      %s70 = sphi 0, %s69
      %s84 = sphi 0, %s70
      %s90 = sphi 0, %s92
      %s93 = sphi 0, %s90
      %s94 = sphi 0, %s93
      %s110 = sphi 0, %s94
    $region4: #{tpu_custom_call.1} parent=1 // loop_header_branch
      %15 = sbr.rel (%p13) target = $region8
    $region5: #{tpu_custom_call.1} parent=1 // loop_body
      %s17 = ssub.s32 %s12, 1
      %s18 = ssub.s32 %s12, 2
      %s19 = sadd.s32 %s12, 1
      %s20 = ssub.s32 %s12, %s19
      %p21 = scmp.eq.s32.totalorder %s20, 0
      %s23 = sadd.s32 %s22, 1
      %s24 = scalar_select %p21, %s22, %s23
      %p27 = pneg %p21
      %p28 = scmp.eq.s32.totalorder %s12, 1
      %p29 = por %p27, %p28
      %p30 = scmp.ne.s32.totalorder %s22, %s25
      %p31 = scmp.eq.s32.totalorder %s12, 0
      %p32 = por %p30, %p31
      %p33 = scmp.ne.s32.totalorder %s22, %s25
      %p34 = scmp.eq.s32.totalorder %s17, 1
      %p35 = por %p33, %p34
      %p36 = scmp.ne.s32.totalorder %s25, %s26
      %p37 = scmp.eq.s32.totalorder %s17, 0
      %p38 = por %p36, %p37
      %p39 = scmp.ne.s32.totalorder %s25, %s26
      %p40 = scmp.eq.s32.totalorder %s18, 1
      %p41 = por %p39, %p40
      %p43 = scmp.ne.s32.totalorder %s26, %s42
      %p44 = scmp.eq.s32.totalorder %s18, 0
      %p45 = por %p43, %p44
      %s47 = sadd.s32 %s46, 1
      %p50 = scmp.eq.s32.totalorder %s12, 1
      %p51 = scmp.ne.s32.totalorder %s46, %s48
      %p52 = scmp.eq.s32.totalorder %s12, 0
      %p53 = por %p51, %p52
      %p54 = scmp.ne.s32.totalorder %s46, %s48
      %p55 = scmp.eq.s32.totalorder %s17, 1
      %p56 = por %p54, %p55
      %p57 = scmp.ne.s32.totalorder %s48, %s49
      %p58 = scmp.eq.s32.totalorder %s17, 0
      %p59 = por %p57, %p58
      %p60 = scmp.ne.s32.totalorder %s48, %s49
      %p61 = scmp.eq.s32.totalorder %s18, 1
      %p62 = por %p60, %p61
      %p64 = scmp.ne.s32.totalorder %s49, %s63
      %p65 = scmp.eq.s32.totalorder %s18, 0
      %p66 = por %p64, %p65
      %s68 = sadd.s32 %s67, 1
      %p71 = scmp.eq.s32.totalorder %s12, 1
      %p72 = scmp.ne.s32.totalorder %s67, %s69
      %p73 = scmp.eq.s32.totalorder %s12, 0
      %p74 = por %p72, %p73
      %p75 = scmp.ne.s32.totalorder %s67, %s69
      %p76 = scmp.eq.s32.totalorder %s17, 1
      %p77 = por %p75, %p76
      %p78 = scmp.ne.s32.totalorder %s69, %s70
      %p79 = scmp.eq.s32.totalorder %s17, 0
      %p80 = por %p78, %p79
      %p81 = scmp.ne.s32.totalorder %s69, %s70
      %p82 = scmp.eq.s32.totalorder %s18, 1
      %p83 = por %p81, %p82
      %p85 = scmp.ne.s32.totalorder %s70, %s84
      %p86 = scmp.eq.s32.totalorder %s18, 0
      %p87 = por %p85, %p86
      %s88 = ssub.s32 %s12, %s19
      %p89 = scmp.eq.s32.totalorder %s88, 0
      %s91 = sadd.s32 %s90, 1
      %s92 = scalar_select %p89, %s90, %s91
      %p95 = pneg %p89
      %p96 = scmp.eq.s32.totalorder %s12, 1
      %p97 = por %p95, %p96
      %p98 = scmp.ne.s32.totalorder %s90, %s93
      %p99 = scmp.eq.s32.totalorder %s12, 0
      %p100 = por %p98, %p99
      %p101 = scmp.ne.s32.totalorder %s90, %s93
      %p102 = scmp.eq.s32.totalorder %s17, 1
      %p103 = por %p101, %p102
      %p104 = scmp.ne.s32.totalorder %s93, %s94
      %p105 = scmp.eq.s32.totalorder %s17, 0
      %p106 = por %p104, %p105
      %p107 = scmp.ne.s32.totalorder %s93, %s94
      %p108 = scmp.eq.s32.totalorder %s18, 1
      %p109 = por %p107, %p108
      %p111 = scmp.ne.s32.totalorder %s94, %s110
      %p112 = scmp.eq.s32.totalorder %s18, 0
      %p113 = por %p111, %p112
      %p114 = scmp.le.s32.totalorder 1, %s12
      %p115 = scmp.lt.s32.totalorder %s12, 3
      %p116 = pnand %p114, %p115
      %p117 = pneg %p116
      // Predicated region
      $region9: #{tpu_custom_call.1} parent=5 // pred_check
        _
      $region10: #{tpu_custom_call.1} parent=5 // pred_check_branch
        %119 = sbr.rel (%p116) target = $region12
      $region11: #{tpu_custom_call.1} parent=5 // pred_region
        %s120 = ssub.s32 %s12, 1
        // Predicated region
        $region13: #{tpu_custom_call.1} parent=11 // pred_check
          %p121 = pneg %p59
        $region14: #{tpu_custom_call.1} parent=11 // pred_check_branch
          %123 = sbr.rel (%p121) target = $region16
        $region15: #{tpu_custom_call.1} parent=11 // pred_region
          _
        $region16: #{tpu_custom_call.1} parent=11 // pred_fallthru
          _
        // Predicated region
        $region17: #{tpu_custom_call.1} parent=11 // pred_check
          %p124 = pneg %p80
        $region18: #{tpu_custom_call.1} parent=11 // pred_check_branch
          %126 = sbr.rel (%p124) target = $region20
        $region19: #{tpu_custom_call.1} parent=11 // pred_region
          _
        $region20: #{tpu_custom_call.1} parent=11 // pred_fallthru
          _
      $region12: #{tpu_custom_call.1} parent=5 // pred_fallthru
        _
      %p127 = scmp.lt.s32.totalorder %s12, 2
      // Predicated region
      $region21: #{tpu_custom_call.1} parent=5 // pred_check
        %p128 = pneg %p127
      $region22: #{tpu_custom_call.1} parent=5 // pred_check_branch
        %130 = sbr.rel (%p128) target = $region24
      $region23: #{tpu_custom_call.1} parent=5 // pred_region
        // Predicated region
        $region25: #{tpu_custom_call.1} parent=23 // pred_check
          %p131 = pneg %p32
        $region26: #{tpu_custom_call.1} parent=23 // pred_check_branch
          %133 = sbr.rel (%p131) target = $region28
        $region27: #{tpu_custom_call.1} parent=23 // pred_region
          %p134 = scmp.lt.s32.totalorder %s12, 1
          %s135 = scalar_select %p134, %s12, 1
          %s136 = smul.addr %s135, 3
          %s137 = smul.addr %s136, 2
          %s138 = scalar_lea.vmem %s0, %s137
        $region28: #{tpu_custom_call.1} parent=23 // pred_fallthru
          _
      $region24: #{tpu_custom_call.1} parent=5 // pred_fallthru
        _
      %p139 = scmp.le.s32.totalorder 1, %s12
      %p140 = scmp.lt.s32.totalorder %s12, 3
      %p141 = pnand %p139, %p140
      %p142 = pneg %p141
      // Predicated region
      $region29: #{tpu_custom_call.1} parent=5 // pred_check
        _
      $region30: #{tpu_custom_call.1} parent=5 // pred_check_branch
        %144 = sbr.rel (%p141) target = $region32
      $region31: #{tpu_custom_call.1} parent=5 // pred_region
        %s145 = ssub.s32 %s12, 1
        %p146 = scmp.lt.s32.totalorder %s17, 1
        %s147 = scalar_select %p146, %s17, 1
        %s148 = smul.addr %s147, 3
        %s149 = smul.addr %s148, 2
        %s150 = scalar_lea.vmem %s0, %s149
        %p151 = pneg %p38
        %p152 = pneg %p35
        %p153 = pneg %p59
        %p154 = pneg %p56
        %p155 = pneg %p80
        %p156 = pneg %p77
        %p157 = pneg %p106
        %p158 = pneg %p103
        %s159 = sand.u32 %s93, 1
        %s160 = scalar_lea.sflag [#allocation3], %s159
        %s161 = sand.u32 %s93, 1
        %s162 = smul.addr %s161, 32
        %s163 = scalar_lea.vmem [#allocation2], %s162
        %p164 = scmp.lt.s32.totalorder %s17, 1
        %s165 = scalar_select %p164, %s17, 1
        %s166 = smul.addr %s165, 3
        %s167 = smul.addr %s166, 2
        %s168 = scalar_lea.vmem %s0, %s167
        %v170 = vld [vmem:[%s168] sm:$0x3f]
        %v171 = vld [vmem:[%s1] sm:$0xf]
        %v172 = vld [vmem:[%s1 + $0x4] sm:$0xf]
        %s173 = scalar_lea.vmem %s1, 8
        %v174 = vld [vmem:[%s173] sm:$0xf]
        %v175 = vld [vmem:[%s173 + $0x4] sm:$0xf]
        %v178 = vunpack.c.l.b16 %v174
        %v179 = vunpack.c.l.b16 %v175
        %v180 = vpack.c.b16 %v179, %v178
        %v182 = vcombine.high %v170, %v170
        %v184 = vunpack.c.l.s4 1983009808
        %v185 = vunpack.c.0.s8 %v184
        %v186 = vlaneseq
        %v187 = vshrl.u32 %v186, 7
        %v188 = vsub.s32 %v185, %v187
        %v189 = vrot.slane %v170, %v188
        %v191 = vunpack.c.l.s4 1983009808
        %v192 = vunpack.c.0.s8 %v191
        %v193 = vlaneseq
        %v194 = vshrl.u32 %v193, 7
        %v195 = vsub.s32 %v192, %v194
        %v196 = vrot.slane %v182, %v195
        %v197 = vcombine.high %v189, %v189
        %198 = vrot.lane.b32.xlu0 %v189, 127
        %v199 = vpop.permute.xlu0 %198
        %200 = vrot.lane.b32.xlu0 %v197, 127
        %v201 = vpop.permute.xlu0 %200
        %202 = vrot.lane.b32.xlu0 %v196, 127
        %v203 = vpop.permute.xlu0 %202
        %vm204 = vcmask 1039360
        %v205 = vsel %vm204, %v199, %v201
        %v206 = vsel %vm204, %v201, %v203
        %vm207 = vcmask 31744
        %v209 = vsel %vm207, %v180, 0
        %vm211 = vcmask 1041408
        %v213 = vsel %vm211, %v205, 0
        %v216 = vsel %vm211, %v206, 0
        %v219 = vsel %vm211, %v203, 0
        %221 = vmatprep.subr.bf16.mxu0 %v216
        %222 = vmatpush1.bf16.msra.mxu0 %v213
        %223 = vmatprep.subr.bf16.mxu0 0
        %224 = vmatpush1.bf16.msra.mxu0 0
        %225 = vmatprep.subr.bf16.mxu0 0
        %226 = vmatpush1.bf16.msra.mxu0 0
        %227 = vmatprep.subr.bf16.mxu0 0
        %228 = vmatpush1.bf16.msra.mxu0 0
        %229 = vmatprep.subr.bf16.mxu0 0
        %230 = vmatpush1.bf16.msra.mxu0 0
        %231 = vmatprep.subr.bf16.mxu0 0
        %232 = vmatpush1.bf16.msra.mxu0 0
        %233 = vmatprep.subr.bf16.mxu0 0
        %234 = vmatpush1.bf16.msra.mxu0 0
        %235 = vmatprep.subr.bf16.mxu0 0
        %236 = vmatpush1.bf16.msra.mxu0 0
        %237 = vmatprep.subr.bf16.mxu0 0
        %238 = vmatpush1.bf16.msra.mxu0 0
        %239 = vmatprep.subr.bf16.mxu0 0
        %240 = vmatpush1.bf16.msra.mxu0 0
        %241 = vmatprep.subr.bf16.mxu0 0
        %242 = vmatpush1.bf16.msra.mxu0 0
        %243 = vmatprep.subr.bf16.mxu0 0
        %244 = vmatpush1.bf16.msra.mxu0 0
        %245 = vmatprep.subr.bf16.mxu0 0
        %246 = vmatpush1.bf16.msra.mxu0 0
        %247 = vmatprep.subr.bf16.mxu0 0
        %248 = vmatpush1.bf16.msra.mxu0 0
        %249 = vmatprep.subr.bf16.mxu0 0
        %250 = vmatpush1.bf16.msra.mxu0 0
        %251 = vmatprep.subr.bf16.mxu0 0
        %252 = vmatpush1.bf16.msra.mxu0 0
        %253 = vmatprep.mubr.bf16.mxu0 0
        %254 = vmatmul.mubr.bf16.gmra.mrb[0].mxu0 %v209
        %v255 = vpop.f32.mrb[0].mxu0
        %v256 = vadd.f32 0.0, %v255
        %v257 = vpop.f32.mrb[0].mxu0
        %v258 = vadd.f32 0.0, %v257
        %v259 = vpop.f32.mrb[0].mxu0
        %v260 = vadd.f32 0.0, %v259
        %v261 = vpop.f32.mrb[0].mxu0
        %v262 = vadd.f32 0.0, %v261
        %263 = vdwg.mxu0
        %264 = vmatprep.subr.bf16.mxu0 0
        %265 = vmatpush1.bf16.msra.mxu0 %v219
        %266 = vmatprep.subr.bf16.mxu0 0
        %267 = vmatpush1.bf16.msra.mxu0 0
        %268 = vmatprep.subr.bf16.mxu0 0
        %269 = vmatpush1.bf16.msra.mxu0 0
        %270 = vmatprep.subr.bf16.mxu0 0
        %271 = vmatpush1.bf16.msra.mxu0 0
        %272 = vmatprep.subr.bf16.mxu0 0
        %273 = vmatpush1.bf16.msra.mxu0 0
        %274 = vmatprep.subr.bf16.mxu0 0
        %275 = vmatpush1.bf16.msra.mxu0 0
        %276 = vmatprep.subr.bf16.mxu0 0
        %277 = vmatpush1.bf16.msra.mxu0 0
        %278 = vmatprep.subr.bf16.mxu0 0
        %279 = vmatpush1.bf16.msra.mxu0 0
        %280 = vmatprep.subr.bf16.mxu0 0
        %281 = vmatpush1.bf16.msra.mxu0 0
        %282 = vmatprep.subr.bf16.mxu0 0
        %283 = vmatpush1.bf16.msra.mxu0 0
        %284 = vmatprep.subr.bf16.mxu0 0
        %285 = vmatpush1.bf16.msra.mxu0 0
        %286 = vmatprep.subr.bf16.mxu0 0
        %287 = vmatpush1.bf16.msra.mxu0 0
        %288 = vmatprep.subr.bf16.mxu0 0
        %289 = vmatpush1.bf16.msra.mxu0 0
        %290 = vmatprep.subr.bf16.mxu0 0
        %291 = vmatpush1.bf16.msra.mxu0 0
        %292 = vmatprep.subr.bf16.mxu0 0
        %293 = vmatpush1.bf16.msra.mxu0 0
        %294 = vmatprep.subr.bf16.mxu0 0
        %295 = vmatpush1.bf16.msra.mxu0 0
        %296 = vmatprep.mubr.bf16.mxu0 0
        %297 = vmatmul.mubr.bf16.gmra.mrb[0].mxu0 %v209
        %v298 = vpop.f32.mrb[0].mxu0
        %v299 = vadd.f32 0.0, %v298
        %v300 = vpop.f32.mrb[0].mxu0
        %v301 = vpop.f32.mrb[0].mxu0
        %v302 = vadd.f32 0.0, %v301
        %v303 = vpop.f32.mrb[0].mxu0
        %304 = vdwg.mxu0
        %v307 = vunpack.c.l.b16 %v171
        %v308 = vunpack.c.l.b16 %v172
        %v309 = vpack.c.b16 %v308, %v307
        %v311 = vsel %vm207, %v309, 0
        %v314 = vsel %vm211, %v189, 0
        %v317 = vsel %vm211, %v197, 0
        %v320 = vsel %vm211, %v196, 0
        %322 = vmatprep.subr.bf16.mxu0 %v317
        %323 = vmatpush1.bf16.msra.mxu0 %v314
        %324 = vmatprep.subr.bf16.mxu0 0
        %325 = vmatpush1.bf16.msra.mxu0 0
        %326 = vmatprep.subr.bf16.mxu0 0
        %327 = vmatpush1.bf16.msra.mxu0 0
        %328 = vmatprep.subr.bf16.mxu0 0
        %329 = vmatpush1.bf16.msra.mxu0 0
        %330 = vmatprep.subr.bf16.mxu0 0
        %331 = vmatpush1.bf16.msra.mxu0 0
        %332 = vmatprep.subr.bf16.mxu0 0
        %333 = vmatpush1.bf16.msra.mxu0 0
        %334 = vmatprep.subr.bf16.mxu0 0
        %335 = vmatpush1.bf16.msra.mxu0 0
        %336 = vmatprep.subr.bf16.mxu0 0
        %337 = vmatpush1.bf16.msra.mxu0 0
        %338 = vmatprep.subr.bf16.mxu0 0
        %339 = vmatpush1.bf16.msra.mxu0 0
        %340 = vmatprep.subr.bf16.mxu0 0
        %341 = vmatpush1.bf16.msra.mxu0 0
        %342 = vmatprep.subr.bf16.mxu0 0
        %343 = vmatpush1.bf16.msra.mxu0 0
        %344 = vmatprep.subr.bf16.mxu0 0
        %345 = vmatpush1.bf16.msra.mxu0 0
        %346 = vmatprep.subr.bf16.mxu0 0
        %347 = vmatpush1.bf16.msra.mxu0 0
        %348 = vmatprep.subr.bf16.mxu0 0
        %349 = vmatpush1.bf16.msra.mxu0 0
        %350 = vmatprep.subr.bf16.mxu0 0
        %351 = vmatpush1.bf16.msra.mxu0 0
        %352 = vmatprep.subr.bf16.mxu0 0
        %353 = vmatpush1.bf16.msra.mxu0 0
        %354 = vmatprep.mubr.bf16.mxu0 0
        %355 = vmatmul.mubr.bf16.gmra.mrb[0].mxu0 %v311
        %v356 = vpop.f32.mrb[0].mxu0
        %v357 = vadd.f32 %v256, %v356
        %v358 = vpop.f32.mrb[0].mxu0
        %v359 = vadd.f32 %v258, %v358
        %v360 = vpop.f32.mrb[0].mxu0
        %v361 = vadd.f32 %v260, %v360
        %v362 = vpop.f32.mrb[0].mxu0
        %v363 = vadd.f32 %v262, %v362
        %364 = vdwg.mxu0
        %365 = vmatprep.subr.bf16.mxu0 0
        %366 = vmatpush1.bf16.msra.mxu0 %v320
        %367 = vmatprep.subr.bf16.mxu0 0
        %368 = vmatpush1.bf16.msra.mxu0 0
        %369 = vmatprep.subr.bf16.mxu0 0
        %370 = vmatpush1.bf16.msra.mxu0 0
        %371 = vmatprep.subr.bf16.mxu0 0
        %372 = vmatpush1.bf16.msra.mxu0 0
        %373 = vmatprep.subr.bf16.mxu0 0
        %374 = vmatpush1.bf16.msra.mxu0 0
        %375 = vmatprep.subr.bf16.mxu0 0
        %376 = vmatpush1.bf16.msra.mxu0 0
        %377 = vmatprep.subr.bf16.mxu0 0
        %378 = vmatpush1.bf16.msra.mxu0 0
        %379 = vmatprep.subr.bf16.mxu0 0
        %380 = vmatpush1.bf16.msra.mxu0 0
        %381 = vmatprep.subr.bf16.mxu0 0
        %382 = vmatpush1.bf16.msra.mxu0 0
        %383 = vmatprep.subr.bf16.mxu0 0
        %384 = vmatpush1.bf16.msra.mxu0 0
        %385 = vmatprep.subr.bf16.mxu0 0
        %386 = vmatpush1.bf16.msra.mxu0 0
        %387 = vmatprep.subr.bf16.mxu0 0
        %388 = vmatpush1.bf16.msra.mxu0 0
        %389 = vmatprep.subr.bf16.mxu0 0
        %390 = vmatpush1.bf16.msra.mxu0 0
        %391 = vmatprep.subr.bf16.mxu0 0
        %392 = vmatpush1.bf16.msra.mxu0 0
        %393 = vmatprep.subr.bf16.mxu0 0
        %394 = vmatpush1.bf16.msra.mxu0 0
        %395 = vmatprep.subr.bf16.mxu0 0
        %396 = vmatpush1.bf16.msra.mxu0 0
        %397 = vmatprep.mubr.bf16.mxu0 0
        %398 = vmatmul.mubr.bf16.gmra.mrb[0].mxu0 %v311
        %v399 = vpop.f32.mrb[0].mxu0
        %v400 = vadd.f32 %v299, %v399
        %v401 = vpop.f32.mrb[0].mxu0
        %v402 = vpop.f32.mrb[0].mxu0
        %v403 = vadd.f32 %v302, %v402
        %v404 = vpop.f32.mrb[0].mxu0
        %405 = vdwg.mxu0
        %s406 = scalar_lea.vmem %s1, 16
        %v407 = vld [vmem:[%s406] sm:$0xf]
        %v408 = vld [vmem:[%s406 + $0x4] sm:$0xf]
        %v411 = vunpack.c.l.b16 %v407
        %v412 = vunpack.c.l.b16 %v408
        %v413 = vpack.c.b16 %v412, %v411
        %414 = vrot.lane.b32.xlu0 %v189, 126
        %v415 = vpop.permute.xlu0 %414
        %416 = vrot.lane.b32.xlu0 %v197, 126
        %v417 = vpop.permute.xlu0 %416
        %418 = vrot.lane.b32.xlu0 %v196, 126
        %v419 = vpop.permute.xlu0 %418
        %vm420 = vcmask 1031168
        %v421 = vsel %vm420, %v415, %v417
        %v422 = vsel %vm420, %v417, %v419
        %v424 = vsel %vm207, %v413, 0
        %v427 = vsel %vm211, %v421, 0
        %v430 = vsel %vm211, %v422, 0
        %v433 = vsel %vm211, %v419, 0
        %435 = vmatprep.subr.bf16.mxu0 %v430
        %436 = vmatpush1.bf16.msra.mxu0 %v427
        %437 = vmatprep.subr.bf16.mxu0 0
        %438 = vmatpush1.bf16.msra.mxu0 0
        %439 = vmatprep.subr.bf16.mxu0 0
        %440 = vmatpush1.bf16.msra.mxu0 0
        %441 = vmatprep.subr.bf16.mxu0 0
        %442 = vmatpush1.bf16.msra.mxu0 0
        %443 = vmatprep.subr.bf16.mxu0 0
        %444 = vmatpush1.bf16.msra.mxu0 0
        %445 = vmatprep.subr.bf16.mxu0 0
        %446 = vmatpush1.bf16.msra.mxu0 0
        %447 = vmatprep.subr.bf16.mxu0 0
        %448 = vmatpush1.bf16.msra.mxu0 0
        %449 = vmatprep.subr.bf16.mxu0 0
        %450 = vmatpush1.bf16.msra.mxu0 0
        %451 = vmatprep.subr.bf16.mxu0 0
        %452 = vmatpush1.bf16.msra.mxu0 0
        %453 = vmatprep.subr.bf16.mxu0 0
        %454 = vmatpush1.bf16.msra.mxu0 0
        %455 = vmatprep.subr.bf16.mxu0 0
        %456 = vmatpush1.bf16.msra.mxu0 0
        %457 = vmatprep.subr.bf16.mxu0 0
        %458 = vmatpush1.bf16.msra.mxu0 0
        %459 = vmatprep.subr.bf16.mxu0 0
        %460 = vmatpush1.bf16.msra.mxu0 0
        %461 = vmatprep.subr.bf16.mxu0 0
        %462 = vmatpush1.bf16.msra.mxu0 0
        %463 = vmatprep.subr.bf16.mxu0 0
        %464 = vmatpush1.bf16.msra.mxu0 0
        %465 = vmatprep.subr.bf16.mxu0 0
        %466 = vmatpush1.bf16.msra.mxu0 0
        %467 = vmatprep.mubr.bf16.mxu0 0
        %468 = vmatmul.mubr.bf16.gmra.mrb[0].mxu0 %v424
        %v469 = vpop.f32.mrb[0].mxu0
        %v470 = vadd.f32 0.0, %v469
        %v471 = vpop.f32.mrb[0].mxu0
        %v472 = vadd.f32 0.0, %v471
        %v473 = vpop.f32.mrb[0].mxu0
        %v474 = vadd.f32 0.0, %v473
        %v475 = vpop.f32.mrb[0].mxu0
        %v476 = vadd.f32 0.0, %v475
        %477 = vdwg.mxu0
        %478 = vmatprep.subr.bf16.mxu0 0
        %479 = vmatpush1.bf16.msra.mxu0 %v433
        %480 = vmatprep.subr.bf16.mxu0 0
        %481 = vmatpush1.bf16.msra.mxu0 0
        %482 = vmatprep.subr.bf16.mxu0 0
        %483 = vmatpush1.bf16.msra.mxu0 0
        %484 = vmatprep.subr.bf16.mxu0 0
        %485 = vmatpush1.bf16.msra.mxu0 0
        %486 = vmatprep.subr.bf16.mxu0 0
        %487 = vmatpush1.bf16.msra.mxu0 0
        %488 = vmatprep.subr.bf16.mxu0 0
        %489 = vmatpush1.bf16.msra.mxu0 0
        %490 = vmatprep.subr.bf16.mxu0 0
        %491 = vmatpush1.bf16.msra.mxu0 0
        %492 = vmatprep.subr.bf16.mxu0 0
        %493 = vmatpush1.bf16.msra.mxu0 0
        %494 = vmatprep.subr.bf16.mxu0 0
        %495 = vmatpush1.bf16.msra.mxu0 0
        %496 = vmatprep.subr.bf16.mxu0 0
        %497 = vmatpush1.bf16.msra.mxu0 0
        %498 = vmatprep.subr.bf16.mxu0 0
        %499 = vmatpush1.bf16.msra.mxu0 0
        %500 = vmatprep.subr.bf16.mxu0 0
        %501 = vmatpush1.bf16.msra.mxu0 0
        %502 = vmatprep.subr.bf16.mxu0 0
        %503 = vmatpush1.bf16.msra.mxu0 0
        %504 = vmatprep.subr.bf16.mxu0 0
        %505 = vmatpush1.bf16.msra.mxu0 0
        %506 = vmatprep.subr.bf16.mxu0 0
        %507 = vmatpush1.bf16.msra.mxu0 0
        %508 = vmatprep.subr.bf16.mxu0 0
        %509 = vmatpush1.bf16.msra.mxu0 0
        %510 = vmatprep.mubr.bf16.mxu0 0
        %511 = vmatmul.mubr.bf16.gmra.mrb[0].mxu0 %v424
        %v512 = vpop.f32.mrb[0].mxu0
        %v513 = vadd.f32 0.0, %v512
        %v514 = vpop.f32.mrb[0].mxu0
        %v515 = vpop.f32.mrb[0].mxu0
        %v516 = vadd.f32 0.0, %v515
        %v517 = vpop.f32.mrb[0].mxu0
        %518 = vdwg.mxu0
        %v519 = vadd.f32 %v357, %v470
        %v520 = vadd.f32 %v359, %v472
        %v521 = vadd.f32 %v400, %v513
        %v522 = vadd.f32 %v361, %v474
        %v523 = vadd.f32 %v363, %v476
        %v524 = vadd.f32 %v403, %v516
        %s525 = scalar_lea.vmem %s1, 24
        %v526 = vld [vmem:[%s525] sm:$0xf]
        %v527 = vld [vmem:[%s525 + $0x4] sm:$0xf]
        %v530 = vunpack.c.l.b16 %v526
        %v531 = vunpack.c.l.b16 %v527
        %v532 = vpack.c.b16 %v531, %v530
        %533 = vrot.lane.b32.xlu0 %v189, 110
        %v534 = vpop.permute.xlu0 %533
        %535 = vrot.lane.b32.xlu0 %v197, 110
        %v536 = vpop.permute.xlu0 %535
        %537 = vrot.lane.b32.xlu0 %v196, 110
        %v538 = vpop.permute.xlu0 %537
        %vm539 = vcmask 900096
        %v540 = vsel %vm539, %v534, %v536
        %v541 = vsel %vm539, %v536, %v538
        %v543 = vsel %vm207, %v532, 0
        %v546 = vsel %vm211, %v540, 0
        %v549 = vsel %vm211, %v541, 0
        %v552 = vsel %vm211, %v538, 0
        %554 = vmatprep.subr.bf16.mxu0 %v549
        %555 = vmatpush1.bf16.msra.mxu0 %v546
        %556 = vmatprep.subr.bf16.mxu0 0
        %557 = vmatpush1.bf16.msra.mxu0 0
        %558 = vmatprep.subr.bf16.mxu0 0
        %559 = vmatpush1.bf16.msra.mxu0 0
        %560 = vmatprep.subr.bf16.mxu0 0
        %561 = vmatpush1.bf16.msra.mxu0 0
        %562 = vmatprep.subr.bf16.mxu0 0
        %563 = vmatpush1.bf16.msra.mxu0 0
        %564 = vmatprep.subr.bf16.mxu0 0
        %565 = vmatpush1.bf16.msra.mxu0 0
        %566 = vmatprep.subr.bf16.mxu0 0
        %567 = vmatpush1.bf16.msra.mxu0 0
        %568 = vmatprep.subr.bf16.mxu0 0
        %569 = vmatpush1.bf16.msra.mxu0 0
        %570 = vmatprep.subr.bf16.mxu0 0
        %571 = vmatpush1.bf16.msra.mxu0 0
        %572 = vmatprep.subr.bf16.mxu0 0
        %573 = vmatpush1.bf16.msra.mxu0 0
        %574 = vmatprep.subr.bf16.mxu0 0
        %575 = vmatpush1.bf16.msra.mxu0 0
        %576 = vmatprep.subr.bf16.mxu0 0
        %577 = vmatpush1.bf16.msra.mxu0 0
        %578 = vmatprep.subr.bf16.mxu0 0
        %579 = vmatpush1.bf16.msra.mxu0 0
        %580 = vmatprep.subr.bf16.mxu0 0
        %581 = vmatpush1.bf16.msra.mxu0 0
        %582 = vmatprep.subr.bf16.mxu0 0
        %583 = vmatpush1.bf16.msra.mxu0 0
        %584 = vmatprep.subr.bf16.mxu0 0
        %585 = vmatpush1.bf16.msra.mxu0 0
        %586 = vmatprep.mubr.bf16.mxu0 0
        %587 = vmatmul.mubr.bf16.gmra.mrb[0].mxu0 %v543
        %v588 = vpop.f32.mrb[0].mxu0
        %v589 = vadd.f32 0.0, %v588
        %v590 = vpop.f32.mrb[0].mxu0
        %v591 = vadd.f32 0.0, %v590
        %v592 = vpop.f32.mrb[0].mxu0
        %v593 = vadd.f32 0.0, %v592
        %v594 = vpop.f32.mrb[0].mxu0
        %v595 = vadd.f32 0.0, %v594
        %596 = vdwg.mxu0
        %597 = vmatprep.subr.bf16.mxu0 0
        %598 = vmatpush1.bf16.msra.mxu0 %v552
        %599 = vmatprep.subr.bf16.mxu0 0
        %600 = vmatpush1.bf16.msra.mxu0 0
        %601 = vmatprep.subr.bf16.mxu0 0
        %602 = vmatpush1.bf16.msra.mxu0 0
        %603 = vmatprep.subr.bf16.mxu0 0
        %604 = vmatpush1.bf16.msra.mxu0 0
        %605 = vmatprep.subr.bf16.mxu0 0
        %606 = vmatpush1.bf16.msra.mxu0 0
        %607 = vmatprep.subr.bf16.mxu0 0
        %608 = vmatpush1.bf16.msra.mxu0 0
        %609 = vmatprep.subr.bf16.mxu0 0
        %610 = vmatpush1.bf16.msra.mxu0 0
        %611 = vmatprep.subr.bf16.mxu0 0
        %612 = vmatpush1.bf16.msra.mxu0 0
        %613 = vmatprep.subr.bf16.mxu0 0
        %614 = vmatpush1.bf16.msra.mxu0 0
        %615 = vmatprep.subr.bf16.mxu0 0
        %616 = vmatpush1.bf16.msra.mxu0 0
        %617 = vmatprep.subr.bf16.mxu0 0
        %618 = vmatpush1.bf16.msra.mxu0 0
        %619 = vmatprep.subr.bf16.mxu0 0
        %620 = vmatpush1.bf16.msra.mxu0 0
        %621 = vmatprep.subr.bf16.mxu0 0
        %622 = vmatpush1.bf16.msra.mxu0 0
        %623 = vmatprep.subr.bf16.mxu0 0
        %624 = vmatpush1.bf16.msra.mxu0 0
        %625 = vmatprep.subr.bf16.mxu0 0
        %626 = vmatpush1.bf16.msra.mxu0 0
        %627 = vmatprep.subr.bf16.mxu0 0
        %628 = vmatpush1.bf16.msra.mxu0 0
        %629 = vmatprep.mubr.bf16.mxu0 0
        %630 = vmatmul.mubr.bf16.gmra.mrb[0].mxu0 %v543
        %v631 = vpop.f32.mrb[0].mxu0
        %v632 = vadd.f32 0.0, %v631
        %v633 = vpop.f32.mrb[0].mxu0
        %v634 = vpop.f32.mrb[0].mxu0
        %v635 = vadd.f32 0.0, %v634
        %v636 = vpop.f32.mrb[0].mxu0
        %637 = vdwg.mxu0
        %v638 = vadd.f32 %v519, %v589
        %v639 = vadd.f32 %v520, %v591
        %v640 = vadd.f32 %v521, %v632
        %v641 = vadd.f32 %v522, %v593
        %v642 = vadd.f32 %v523, %v595
        %v643 = vadd.f32 %v524, %v635
        %s644 = scalar_lea.vmem %s1, 32
        %v645 = vld [vmem:[%s644] sm:$0xf]
        %v646 = vld [vmem:[%s644 + $0x4] sm:$0xf]
        %v649 = vunpack.c.l.b16 %v645
        %v650 = vunpack.c.l.b16 %v646
        %v651 = vpack.c.b16 %v650, %v649
        %652 = vrot.lane.b32.xlu0 %v189, 109
        %v653 = vpop.permute.xlu0 %652
        %654 = vrot.lane.b32.xlu0 %v197, 109
        %v655 = vpop.permute.xlu0 %654
        %656 = vrot.lane.b32.xlu0 %v196, 109
        %v657 = vpop.permute.xlu0 %656
        %vm658 = vcmask 891904
        %v659 = vsel %vm658, %v653, %v655
        %v660 = vsel %vm658, %v655, %v657
        %v662 = vsel %vm207, %v651, 0
        %v665 = vsel %vm211, %v659, 0
        %v668 = vsel %vm211, %v660, 0
        %v671 = vsel %vm211, %v657, 0
        %673 = vmatprep.subr.bf16.mxu0 %v668
        %674 = vmatpush1.bf16.msra.mxu0 %v665
        %675 = vmatprep.subr.bf16.mxu0 0
        %676 = vmatpush1.bf16.msra.mxu0 0
        %677 = vmatprep.subr.bf16.mxu0 0
        %678 = vmatpush1.bf16.msra.mxu0 0
        %679 = vmatprep.subr.bf16.mxu0 0
        %680 = vmatpush1.bf16.msra.mxu0 0
        %681 = vmatprep.subr.bf16.mxu0 0
        %682 = vmatpush1.bf16.msra.mxu0 0
        %683 = vmatprep.subr.bf16.mxu0 0
        %684 = vmatpush1.bf16.msra.mxu0 0
        %685 = vmatprep.subr.bf16.mxu0 0
        %686 = vmatpush1.bf16.msra.mxu0 0
        %687 = vmatprep.subr.bf16.mxu0 0
        %688 = vmatpush1.bf16.msra.mxu0 0
        %689 = vmatprep.subr.bf16.mxu0 0
        %690 = vmatpush1.bf16.msra.mxu0 0
        %691 = vmatprep.subr.bf16.mxu0 0
        %692 = vmatpush1.bf16.msra.mxu0 0
        %693 = vmatprep.subr.bf16.mxu0 0
        %694 = vmatpush1.bf16.msra.mxu0 0
        %695 = vmatprep.subr.bf16.mxu0 0
        %696 = vmatpush1.bf16.msra.mxu0 0
        %697 = vmatprep.subr.bf16.mxu0 0
        %698 = vmatpush1.bf16.msra.mxu0 0
        %699 = vmatprep.subr.bf16.mxu0 0
        %700 = vmatpush1.bf16.msra.mxu0 0
        %701 = vmatprep.subr.bf16.mxu0 0
        %702 = vmatpush1.bf16.msra.mxu0 0
        %703 = vmatprep.subr.bf16.mxu0 0
        %704 = vmatpush1.bf16.msra.mxu0 0
        %705 = vmatprep.mubr.bf16.mxu0 0
        %706 = vmatmul.mubr.bf16.gmra.mrb[0].mxu0 %v662
        %v707 = vpop.f32.mrb[0].mxu0
        %v708 = vadd.f32 0.0, %v707
        %v709 = vpop.f32.mrb[0].mxu0
        %v710 = vadd.f32 0.0, %v709
        %v711 = vpop.f32.mrb[0].mxu0
        %v712 = vadd.f32 0.0, %v711
        %v713 = vpop.f32.mrb[0].mxu0
        %v714 = vadd.f32 0.0, %v713
        %715 = vdwg.mxu0
        %716 = vmatprep.subr.bf16.mxu0 0
        %717 = vmatpush1.bf16.msra.mxu0 %v671
        %718 = vmatprep.subr.bf16.mxu0 0
        %719 = vmatpush1.bf16.msra.mxu0 0
        %720 = vmatprep.subr.bf16.mxu0 0
        %721 = vmatpush1.bf16.msra.mxu0 0
        %722 = vmatprep.subr.bf16.mxu0 0
        %723 = vmatpush1.bf16.msra.mxu0 0
        %724 = vmatprep.subr.bf16.mxu0 0
        %725 = vmatpush1.bf16.msra.mxu0 0
        %726 = vmatprep.subr.bf16.mxu0 0
        %727 = vmatpush1.bf16.msra.mxu0 0
        %728 = vmatprep.subr.bf16.mxu0 0
        %729 = vmatpush1.bf16.msra.mxu0 0
        %730 = vmatprep.subr.bf16.mxu0 0
        %731 = vmatpush1.bf16.msra.mxu0 0
        %732 = vmatprep.subr.bf16.mxu0 0
        %733 = vmatpush1.bf16.msra.mxu0 0
        %734 = vmatprep.subr.bf16.mxu0 0
        %735 = vmatpush1.bf16.msra.mxu0 0
        %736 = vmatprep.subr.bf16.mxu0 0
        %737 = vmatpush1.bf16.msra.mxu0 0
        %738 = vmatprep.subr.bf16.mxu0 0
        %739 = vmatpush1.bf16.msra.mxu0 0
        %740 = vmatprep.subr.bf16.mxu0 0
        %741 = vmatpush1.bf16.msra.mxu0 0
        %742 = vmatprep.subr.bf16.mxu0 0
        %743 = vmatpush1.bf16.msra.mxu0 0
        %744 = vmatprep.subr.bf16.mxu0 0
        %745 = vmatpush1.bf16.msra.mxu0 0
        %746 = vmatprep.subr.bf16.mxu0 0
        %747 = vmatpush1.bf16.msra.mxu0 0
        %748 = vmatprep.mubr.bf16.mxu0 0
        %749 = vmatmul.mubr.bf16.gmra.mrb[0].mxu0 %v662
        %v750 = vpop.f32.mrb[0].mxu0
        %v751 = vadd.f32 0.0, %v750
        %v752 = vpop.f32.mrb[0].mxu0
        %v753 = vpop.f32.mrb[0].mxu0
        %v754 = vadd.f32 0.0, %v753
        %v755 = vpop.f32.mrb[0].mxu0
        %756 = vdwg.mxu0
        %v757 = vadd.f32 %v638, %v708
        %v758 = vadd.f32 %v639, %v710
        %v759 = vadd.f32 %v640, %v751
        %v760 = vadd.f32 %v641, %v712
        %v761 = vadd.f32 %v642, %v714
        %v762 = vadd.f32 %v643, %v754
        %s763 = scalar_lea.vmem %s1, 40
        %v764 = vld [vmem:[%s763] sm:$0xf]
        %v765 = vld [vmem:[%s763 + $0x4] sm:$0xf]
        %v768 = vunpack.c.l.b16 %v764
        %v769 = vunpack.c.l.b16 %v765
        %v770 = vpack.c.b16 %v769, %v768
        %771 = vrot.lane.b32.xlu0 %v189, 108
        %v772 = vpop.permute.xlu0 %771
        %773 = vrot.lane.b32.xlu0 %v197, 108
        %v774 = vpop.permute.xlu0 %773
        %775 = vrot.lane.b32.xlu0 %v196, 108
        %v776 = vpop.permute.xlu0 %775
        %vm777 = vcmask 883712
        %v778 = vsel %vm777, %v772, %v774
        %v779 = vsel %vm777, %v774, %v776
        %v781 = vsel %vm207, %v770, 0
        %v784 = vsel %vm211, %v778, 0
        %v787 = vsel %vm211, %v779, 0
        %v790 = vsel %vm211, %v776, 0
        %792 = vmatprep.subr.bf16.mxu0 %v787
        %793 = vmatpush1.bf16.msra.mxu0 %v784
        %794 = vmatprep.subr.bf16.mxu0 0
        %795 = vmatpush1.bf16.msra.mxu0 0
        %796 = vmatprep.subr.bf16.mxu0 0
        %797 = vmatpush1.bf16.msra.mxu0 0
        %798 = vmatprep.subr.bf16.mxu0 0
        %799 = vmatpush1.bf16.msra.mxu0 0
        %800 = vmatprep.subr.bf16.mxu0 0
        %801 = vmatpush1.bf16.msra.mxu0 0
        %802 = vmatprep.subr.bf16.mxu0 0
        %803 = vmatpush1.bf16.msra.mxu0 0
        %804 = vmatprep.subr.bf16.mxu0 0
        %805 = vmatpush1.bf16.msra.mxu0 0
        %806 = vmatprep.subr.bf16.mxu0 0
        %807 = vmatpush1.bf16.msra.mxu0 0
        %808 = vmatprep.subr.bf16.mxu0 0
        %809 = vmatpush1.bf16.msra.mxu0 0
        %810 = vmatprep.subr.bf16.mxu0 0
        %811 = vmatpush1.bf16.msra.mxu0 0
        %812 = vmatprep.subr.bf16.mxu0 0
        %813 = vmatpush1.bf16.msra.mxu0 0
        %814 = vmatprep.subr.bf16.mxu0 0
        %815 = vmatpush1.bf16.msra.mxu0 0
        %816 = vmatprep.subr.bf16.mxu0 0
        %817 = vmatpush1.bf16.msra.mxu0 0
        %818 = vmatprep.subr.bf16.mxu0 0
        %819 = vmatpush1.bf16.msra.mxu0 0
        %820 = vmatprep.subr.bf16.mxu0 0
        %821 = vmatpush1.bf16.msra.mxu0 0
        %822 = vmatprep.subr.bf16.mxu0 0
        %823 = vmatpush1.bf16.msra.mxu0 0
        %824 = vmatprep.mubr.bf16.mxu0 0
        %825 = vmatmul.mubr.bf16.gmra.mrb[0].mxu0 %v781
        %v826 = vpop.f32.mrb[0].mxu0
        %v827 = vadd.f32 0.0, %v826
        %v828 = vpop.f32.mrb[0].mxu0
        %v829 = vadd.f32 0.0, %v828
        %v830 = vpop.f32.mrb[0].mxu0
        %v831 = vadd.f32 0.0, %v830
        %v832 = vpop.f32.mrb[0].mxu0
        %v833 = vadd.f32 0.0, %v832
        %834 = vdwg.mxu0
        %835 = vmatprep.subr.bf16.mxu0 0
        %836 = vmatpush1.bf16.msra.mxu0 %v790
        %837 = vmatprep.subr.bf16.mxu0 0
        %838 = vmatpush1.bf16.msra.mxu0 0
        %839 = vmatprep.subr.bf16.mxu0 0
        %840 = vmatpush1.bf16.msra.mxu0 0
        %841 = vmatprep.subr.bf16.mxu0 0
        %842 = vmatpush1.bf16.msra.mxu0 0
        %843 = vmatprep.subr.bf16.mxu0 0
        %844 = vmatpush1.bf16.msra.mxu0 0
        %845 = vmatprep.subr.bf16.mxu0 0
        %846 = vmatpush1.bf16.msra.mxu0 0
        %847 = vmatprep.subr.bf16.mxu0 0
        %848 = vmatpush1.bf16.msra.mxu0 0
        %849 = vmatprep.subr.bf16.mxu0 0
        %850 = vmatpush1.bf16.msra.mxu0 0
        %851 = vmatprep.subr.bf16.mxu0 0
        %852 = vmatpush1.bf16.msra.mxu0 0
        %853 = vmatprep.subr.bf16.mxu0 0
        %854 = vmatpush1.bf16.msra.mxu0 0
        %855 = vmatprep.subr.bf16.mxu0 0
        %856 = vmatpush1.bf16.msra.mxu0 0
        %857 = vmatprep.subr.bf16.mxu0 0
        %858 = vmatpush1.bf16.msra.mxu0 0
        %859 = vmatprep.subr.bf16.mxu0 0
        %860 = vmatpush1.bf16.msra.mxu0 0
        %861 = vmatprep.subr.bf16.mxu0 0
        %862 = vmatpush1.bf16.msra.mxu0 0
        %863 = vmatprep.subr.bf16.mxu0 0
        %864 = vmatpush1.bf16.msra.mxu0 0
        %865 = vmatprep.subr.bf16.mxu0 0
        %866 = vmatpush1.bf16.msra.mxu0 0
        %867 = vmatprep.mubr.bf16.mxu0 0
        %868 = vmatmul.mubr.bf16.gmra.mrb[0].mxu0 %v781
        %v869 = vpop.f32.mrb[0].mxu0
        %v870 = vadd.f32 0.0, %v869
        %v871 = vpop.f32.mrb[0].mxu0
        %v872 = vpop.f32.mrb[0].mxu0
        %v873 = vadd.f32 0.0, %v872
        %v874 = vpop.f32.mrb[0].mxu0
        %875 = vdwg.mxu0
        %v876 = vadd.f32 %v757, %v827
        %v877 = vadd.f32 %v758, %v829
        %v878 = vadd.f32 %v759, %v870
        %v879 = vadd.f32 %v760, %v831
        %v880 = vadd.f32 %v761, %v833
        %v881 = vadd.f32 %v762, %v873
        %s882 = scalar_lea.vmem %s1, 48
        %v883 = vld [vmem:[%s882] sm:$0xf]
        %v884 = vld [vmem:[%s882 + $0x4] sm:$0xf]
        %v887 = vunpack.c.l.b16 %v883
        %v888 = vunpack.c.l.b16 %v884
        %v889 = vpack.c.b16 %v888, %v887
        %890 = vrot.lane.b32.xlu0 %v189, 92
        %v891 = vpop.permute.xlu0 %890
        %892 = vrot.lane.b32.xlu0 %v197, 92
        %v893 = vpop.permute.xlu0 %892
        %894 = vrot.lane.b32.xlu0 %v196, 92
        %v895 = vpop.permute.xlu0 %894
        %vm896 = vcmask 752640
        %v897 = vsel %vm896, %v891, %v893
        %v898 = vsel %vm896, %v893, %v895
        %v900 = vsel %vm207, %v889, 0
        %v903 = vsel %vm211, %v897, 0
        %v906 = vsel %vm211, %v898, 0
        %v909 = vsel %vm211, %v895, 0
        %911 = vmatprep.subr.bf16.mxu0 %v906
        %912 = vmatpush1.bf16.msra.mxu0 %v903
        %913 = vmatprep.subr.bf16.mxu0 0
        %914 = vmatpush1.bf16.msra.mxu0 0
        %915 = vmatprep.subr.bf16.mxu0 0
        %916 = vmatpush1.bf16.msra.mxu0 0
        %917 = vmatprep.subr.bf16.mxu0 0
        %918 = vmatpush1.bf16.msra.mxu0 0
        %919 = vmatprep.subr.bf16.mxu0 0
        %920 = vmatpush1.bf16.msra.mxu0 0
        %921 = vmatprep.subr.bf16.mxu0 0
        %922 = vmatpush1.bf16.msra.mxu0 0
        %923 = vmatprep.subr.bf16.mxu0 0
        %924 = vmatpush1.bf16.msra.mxu0 0
        %925 = vmatprep.subr.bf16.mxu0 0
        %926 = vmatpush1.bf16.msra.mxu0 0
        %927 = vmatprep.subr.bf16.mxu0 0
        %928 = vmatpush1.bf16.msra.mxu0 0
        %929 = vmatprep.subr.bf16.mxu0 0
        %930 = vmatpush1.bf16.msra.mxu0 0
        %931 = vmatprep.subr.bf16.mxu0 0
        %932 = vmatpush1.bf16.msra.mxu0 0
        %933 = vmatprep.subr.bf16.mxu0 0
        %934 = vmatpush1.bf16.msra.mxu0 0
        %935 = vmatprep.subr.bf16.mxu0 0
        %936 = vmatpush1.bf16.msra.mxu0 0
        %937 = vmatprep.subr.bf16.mxu0 0
        %938 = vmatpush1.bf16.msra.mxu0 0
        %939 = vmatprep.subr.bf16.mxu0 0
        %940 = vmatpush1.bf16.msra.mxu0 0
        %941 = vmatprep.subr.bf16.mxu0 0
        %942 = vmatpush1.bf16.msra.mxu0 0
        %943 = vmatprep.mubr.bf16.mxu0 0
        %944 = vmatmul.mubr.bf16.gmra.mrb[0].mxu0 %v900
        %v945 = vpop.f32.mrb[0].mxu0
        %v946 = vadd.f32 0.0, %v945
        %v947 = vpop.f32.mrb[0].mxu0
        %v948 = vadd.f32 0.0, %v947
        %v949 = vpop.f32.mrb[0].mxu0
        %v950 = vadd.f32 0.0, %v949
        %v951 = vpop.f32.mrb[0].mxu0
        %v952 = vadd.f32 0.0, %v951
        %953 = vdwg.mxu0
        %954 = vmatprep.subr.bf16.mxu0 0
        %955 = vmatpush1.bf16.msra.mxu0 %v909
        %956 = vmatprep.subr.bf16.mxu0 0
        %957 = vmatpush1.bf16.msra.mxu0 0
        %958 = vmatprep.subr.bf16.mxu0 0
        %959 = vmatpush1.bf16.msra.mxu0 0
        %960 = vmatprep.subr.bf16.mxu0 0
        %961 = vmatpush1.bf16.msra.mxu0 0
        %962 = vmatprep.subr.bf16.mxu0 0
        %963 = vmatpush1.bf16.msra.mxu0 0
        %964 = vmatprep.subr.bf16.mxu0 0
        %965 = vmatpush1.bf16.msra.mxu0 0
        %966 = vmatprep.subr.bf16.mxu0 0
        %967 = vmatpush1.bf16.msra.mxu0 0
        %968 = vmatprep.subr.bf16.mxu0 0
        %969 = vmatpush1.bf16.msra.mxu0 0
        %970 = vmatprep.subr.bf16.mxu0 0
        %971 = vmatpush1.bf16.msra.mxu0 0
        %972 = vmatprep.subr.bf16.mxu0 0
        %973 = vmatpush1.bf16.msra.mxu0 0
        %974 = vmatprep.subr.bf16.mxu0 0
        %975 = vmatpush1.bf16.msra.mxu0 0
        %976 = vmatprep.subr.bf16.mxu0 0
        %977 = vmatpush1.bf16.msra.mxu0 0
        %978 = vmatprep.subr.bf16.mxu0 0
        %979 = vmatpush1.bf16.msra.mxu0 0
        %980 = vmatprep.subr.bf16.mxu0 0
        %981 = vmatpush1.bf16.msra.mxu0 0
        %982 = vmatprep.subr.bf16.mxu0 0
        %983 = vmatpush1.bf16.msra.mxu0 0
        %984 = vmatprep.subr.bf16.mxu0 0
        %985 = vmatpush1.bf16.msra.mxu0 0
        %986 = vmatprep.mubr.bf16.mxu0 0
        %987 = vmatmul.mubr.bf16.gmra.mrb[0].mxu0 %v900
        %v988 = vpop.f32.mrb[0].mxu0
        %v989 = vadd.f32 0.0, %v988
        %v990 = vpop.f32.mrb[0].mxu0
        %v991 = vpop.f32.mrb[0].mxu0
        %v992 = vadd.f32 0.0, %v991
        %v993 = vpop.f32.mrb[0].mxu0
        %994 = vdwg.mxu0
        %v995 = vadd.f32 %v876, %v946
        %v996 = vadd.f32 %v877, %v948
        %v997 = vadd.f32 %v878, %v989
        %v998 = vadd.f32 %v879, %v950
        %v999 = vadd.f32 %v880, %v952
        %v1000 = vadd.f32 %v881, %v992
        %s1001 = scalar_lea.vmem %s1, 56
        %v1002 = vld [vmem:[%s1001] sm:$0xf]
        %v1003 = vld [vmem:[%s1001 + $0x4] sm:$0xf]
        %v1006 = vunpack.c.l.b16 %v1002
        %v1007 = vunpack.c.l.b16 %v1003
        %v1008 = vpack.c.b16 %v1007, %v1006
        %1009 = vrot.lane.b32.xlu0 %v189, 91
        %v1010 = vpop.permute.xlu0 %1009
        %1011 = vrot.lane.b32.xlu0 %v197, 91
        %v1012 = vpop.permute.xlu0 %1011
        %1013 = vrot.lane.b32.xlu0 %v196, 91
        %v1014 = vpop.permute.xlu0 %1013
        %vm1015 = vcmask 744448
        %v1016 = vsel %vm1015, %v1010, %v1012
        %v1017 = vsel %vm1015, %v1012, %v1014
        %v1019 = vsel %vm207, %v1008, 0
        %v1022 = vsel %vm211, %v1016, 0
        %v1025 = vsel %vm211, %v1017, 0
        %v1028 = vsel %vm211, %v1014, 0
        %1030 = vmatprep.subr.bf16.mxu0 %v1025
        %1031 = vmatpush1.bf16.msra.mxu0 %v1022
        %1032 = vmatprep.subr.bf16.mxu0 0
        %1033 = vmatpush1.bf16.msra.mxu0 0
        %1034 = vmatprep.subr.bf16.mxu0 0
        %1035 = vmatpush1.bf16.msra.mxu0 0
        %1036 = vmatprep.subr.bf16.mxu0 0
        %1037 = vmatpush1.bf16.msra.mxu0 0
        %1038 = vmatprep.subr.bf16.mxu0 0
        %1039 = vmatpush1.bf16.msra.mxu0 0
        %1040 = vmatprep.subr.bf16.mxu0 0
        %1041 = vmatpush1.bf16.msra.mxu0 0
        %1042 = vmatprep.subr.bf16.mxu0 0
        %1043 = vmatpush1.bf16.msra.mxu0 0
        %1044 = vmatprep.subr.bf16.mxu0 0
        %1045 = vmatpush1.bf16.msra.mxu0 0
        %1046 = vmatprep.subr.bf16.mxu0 0
        %1047 = vmatpush1.bf16.msra.mxu0 0
        %1048 = vmatprep.subr.bf16.mxu0 0
        %1049 = vmatpush1.bf16.msra.mxu0 0
        %1050 = vmatprep.subr.bf16.mxu0 0
        %1051 = vmatpush1.bf16.msra.mxu0 0
        %1052 = vmatprep.subr.bf16.mxu0 0
        %1053 = vmatpush1.bf16.msra.mxu0 0
        %1054 = vmatprep.subr.bf16.mxu0 0
        %1055 = vmatpush1.bf16.msra.mxu0 0
        %1056 = vmatprep.subr.bf16.mxu0 0
        %1057 = vmatpush1.bf16.msra.mxu0 0
        %1058 = vmatprep.subr.bf16.mxu0 0
        %1059 = vmatpush1.bf16.msra.mxu0 0
        %1060 = vmatprep.subr.bf16.mxu0 0
        %1061 = vmatpush1.bf16.msra.mxu0 0
        %1062 = vmatprep.mubr.bf16.mxu0 0
        %1063 = vmatmul.mubr.bf16.gmra.mrb[0].mxu0 %v1019
        %v1064 = vpop.f32.mrb[0].mxu0
        %v1065 = vadd.f32 0.0, %v1064
        %v1066 = vpop.f32.mrb[0].mxu0
        %v1067 = vadd.f32 0.0, %v1066
        %v1068 = vpop.f32.mrb[0].mxu0
        %v1069 = vadd.f32 0.0, %v1068
        %v1070 = vpop.f32.mrb[0].mxu0
        %v1071 = vadd.f32 0.0, %v1070
        %1072 = vdwg.mxu0
        %1073 = vmatprep.subr.bf16.mxu0 0
        %1074 = vmatpush1.bf16.msra.mxu0 %v1028
        %1075 = vmatprep.subr.bf16.mxu0 0
        %1076 = vmatpush1.bf16.msra.mxu0 0
        %1077 = vmatprep.subr.bf16.mxu0 0
        %1078 = vmatpush1.bf16.msra.mxu0 0
        %1079 = vmatprep.subr.bf16.mxu0 0
        %1080 = vmatpush1.bf16.msra.mxu0 0
        %1081 = vmatprep.subr.bf16.mxu0 0
        %1082 = vmatpush1.bf16.msra.mxu0 0
        %1083 = vmatprep.subr.bf16.mxu0 0
        %1084 = vmatpush1.bf16.msra.mxu0 0
        %1085 = vmatprep.subr.bf16.mxu0 0
        %1086 = vmatpush1.bf16.msra.mxu0 0
        %1087 = vmatprep.subr.bf16.mxu0 0
        %1088 = vmatpush1.bf16.msra.mxu0 0
        %1089 = vmatprep.subr.bf16.mxu0 0
        %1090 = vmatpush1.bf16.msra.mxu0 0
        %1091 = vmatprep.subr.bf16.mxu0 0
        %1092 = vmatpush1.bf16.msra.mxu0 0
        %1093 = vmatprep.subr.bf16.mxu0 0
        %1094 = vmatpush1.bf16.msra.mxu0 0
        %1095 = vmatprep.subr.bf16.mxu0 0
        %1096 = vmatpush1.bf16.msra.mxu0 0
        %1097 = vmatprep.subr.bf16.mxu0 0
        %1098 = vmatpush1.bf16.msra.mxu0 0
        %1099 = vmatprep.subr.bf16.mxu0 0
        %1100 = vmatpush1.bf16.msra.mxu0 0
        %1101 = vmatprep.subr.bf16.mxu0 0
        %1102 = vmatpush1.bf16.msra.mxu0 0
        %1103 = vmatprep.subr.bf16.mxu0 0
        %1104 = vmatpush1.bf16.msra.mxu0 0
        %1105 = vmatprep.mubr.bf16.mxu0 0
        %1106 = vmatmul.mubr.bf16.gmra.mrb[0].mxu0 %v1019
        %v1107 = vpop.f32.mrb[0].mxu0
        %v1108 = vadd.f32 0.0, %v1107
        %v1109 = vpop.f32.mrb[0].mxu0
        %v1110 = vpop.f32.mrb[0].mxu0
        %v1111 = vadd.f32 0.0, %v1110
        %v1112 = vpop.f32.mrb[0].mxu0
        %1113 = vdwg.mxu0
        %v1114 = vadd.f32 %v995, %v1065
        %v1115 = vadd.f32 %v996, %v1067
        %v1116 = vadd.f32 %v997, %v1108
        %v1117 = vadd.f32 %v998, %v1069
        %v1118 = vadd.f32 %v999, %v1071
        %v1119 = vadd.f32 %v1000, %v1111
        %s1120 = scalar_lea.vmem %s1, 64
        %v1121 = vld [vmem:[%s1120] sm:$0xf]
        %v1122 = vld [vmem:[%s1120 + $0x4] sm:$0xf]
        %v1125 = vunpack.c.l.b16 %v1121
        %v1126 = vunpack.c.l.b16 %v1122
        %v1127 = vpack.c.b16 %v1126, %v1125
        %1128 = vrot.lane.b32.xlu0 %v189, 90
        %v1129 = vpop.permute.xlu0 %1128
        %1130 = vrot.lane.b32.xlu0 %v197, 90
        %v1131 = vpop.permute.xlu0 %1130
        %1132 = vrot.lane.b32.xlu0 %v196, 90
        %v1133 = vpop.permute.xlu0 %1132
        %vm1134 = vcmask 736256
        %v1135 = vsel %vm1134, %v1129, %v1131
        %v1136 = vsel %vm1134, %v1131, %v1133
        %v1138 = vsel %vm207, %v1127, 0
        %v1141 = vsel %vm211, %v1135, 0
        %v1144 = vsel %vm211, %v1136, 0
        %v1147 = vsel %vm211, %v1133, 0
        %1149 = vmatprep.subr.bf16.mxu0 %v1144
        %1150 = vmatpush1.bf16.msra.mxu0 %v1141
        %1151 = vmatprep.subr.bf16.mxu0 0
        %1152 = vmatpush1.bf16.msra.mxu0 0
        %1153 = vmatprep.subr.bf16.mxu0 0
        %1154 = vmatpush1.bf16.msra.mxu0 0
        %1155 = vmatprep.subr.bf16.mxu0 0
        %1156 = vmatpush1.bf16.msra.mxu0 0
        %1157 = vmatprep.subr.bf16.mxu0 0
        %1158 = vmatpush1.bf16.msra.mxu0 0
        %1159 = vmatprep.subr.bf16.mxu0 0
        %1160 = vmatpush1.bf16.msra.mxu0 0
        %1161 = vmatprep.subr.bf16.mxu0 0
        %1162 = vmatpush1.bf16.msra.mxu0 0
        %1163 = vmatprep.subr.bf16.mxu0 0
        %1164 = vmatpush1.bf16.msra.mxu0 0
        %1165 = vmatprep.subr.bf16.mxu0 0
        %1166 = vmatpush1.bf16.msra.mxu0 0
        %1167 = vmatprep.subr.bf16.mxu0 0
        %1168 = vmatpush1.bf16.msra.mxu0 0
        %1169 = vmatprep.subr.bf16.mxu0 0
        %1170 = vmatpush1.bf16.msra.mxu0 0
        %1171 = vmatprep.subr.bf16.mxu0 0
        %1172 = vmatpush1.bf16.msra.mxu0 0
        %1173 = vmatprep.subr.bf16.mxu0 0
        %1174 = vmatpush1.bf16.msra.mxu0 0
        %1175 = vmatprep.subr.bf16.mxu0 0
        %1176 = vmatpush1.bf16.msra.mxu0 0
        %1177 = vmatprep.subr.bf16.mxu0 0
        %1178 = vmatpush1.bf16.msra.mxu0 0
        %1179 = vmatprep.subr.bf16.mxu0 0
        %1180 = vmatpush1.bf16.msra.mxu0 0
        %1181 = vmatprep.mubr.bf16.mxu0 0
        %1182 = vmatmul.mubr.bf16.gmra.mrb[0].mxu0 %v1138
        %v1183 = vpop.f32.mrb[0].mxu0
        %v1184 = vadd.f32 0.0, %v1183
        %v1185 = vpop.f32.mrb[0].mxu0
        %v1186 = vadd.f32 0.0, %v1185
        %v1187 = vpop.f32.mrb[0].mxu0
        %v1188 = vadd.f32 0.0, %v1187
        %v1189 = vpop.f32.mrb[0].mxu0
        %v1190 = vadd.f32 0.0, %v1189
        %1191 = vdwg.mxu0
        %1192 = vmatprep.subr.bf16.mxu0 0
        %1193 = vmatpush1.bf16.msra.mxu0 %v1147
        %1194 = vmatprep.subr.bf16.mxu0 0
        %1195 = vmatpush1.bf16.msra.mxu0 0
        %1196 = vmatprep.subr.bf16.mxu0 0
        %1197 = vmatpush1.bf16.msra.mxu0 0
        %1198 = vmatprep.subr.bf16.mxu0 0
        %1199 = vmatpush1.bf16.msra.mxu0 0
        %1200 = vmatprep.subr.bf16.mxu0 0
        %1201 = vmatpush1.bf16.msra.mxu0 0
        %1202 = vmatprep.subr.bf16.mxu0 0
        %1203 = vmatpush1.bf16.msra.mxu0 0
        %1204 = vmatprep.subr.bf16.mxu0 0
        %1205 = vmatpush1.bf16.msra.mxu0 0
        %1206 = vmatprep.subr.bf16.mxu0 0
        %1207 = vmatpush1.bf16.msra.mxu0 0
        %1208 = vmatprep.subr.bf16.mxu0 0
        %1209 = vmatpush1.bf16.msra.mxu0 0
        %1210 = vmatprep.subr.bf16.mxu0 0
        %1211 = vmatpush1.bf16.msra.mxu0 0
        %1212 = vmatprep.subr.bf16.mxu0 0
        %1213 = vmatpush1.bf16.msra.mxu0 0
        %1214 = vmatprep.subr.bf16.mxu0 0
        %1215 = vmatpush1.bf16.msra.mxu0 0
        %1216 = vmatprep.subr.bf16.mxu0 0
        %1217 = vmatpush1.bf16.msra.mxu0 0
        %1218 = vmatprep.subr.bf16.mxu0 0
        %1219 = vmatpush1.bf16.msra.mxu0 0
        %1220 = vmatprep.subr.bf16.mxu0 0
        %1221 = vmatpush1.bf16.msra.mxu0 0
        %1222 = vmatprep.subr.bf16.mxu0 0
        %1223 = vmatpush1.bf16.msra.mxu0 0
        %1224 = vmatprep.mubr.bf16.mxu0 0
        %1225 = vmatmul.mubr.bf16.gmra.mrb[0].mxu0 %v1138
        %v1226 = vpop.f32.mrb[0].mxu0
        %v1227 = vadd.f32 0.0, %v1226
        %v1228 = vpop.f32.mrb[0].mxu0
        %v1229 = vpop.f32.mrb[0].mxu0
        %v1230 = vadd.f32 0.0, %v1229
        %v1231 = vpop.f32.mrb[0].mxu0
        %1232 = vdwg.mxu0
        %v1233 = vadd.f32 %v1114, %v1184
        %v1234 = vadd.f32 %v1115, %v1186
        %v1235 = vadd.f32 %v1116, %v1227
        %v1236 = vadd.f32 %v1117, %v1188
        %v1237 = vadd.f32 %v1118, %v1190
        %v1238 = vadd.f32 %v1119, %v1230
        %v1239 = vld [vmem:[%s2] sm:$0xff]
        %v1240 = vld [vmem:[%s2 + $0x8] sm:$0xff]
        %1242 = vset.pattern.permute.xlu0 0
        %1243 = vperm.xlu0 %1242, %v1239
        %v1244 = vpop.permute.xlu0 %1243
        %1247 = vset.pattern.permute.xlu0 0
        %1248 = vperm.xlu0 %1247, %v1240
        %v1249 = vpop.permute.xlu0 %1248
        %v1251 = vadd.f32 %v1233, %v1244
        %v1252 = vadd.f32 %v1234, %v1244
        %v1253 = vadd.f32 %v1235, %v1244
        %v1254 = vadd.f32 %v1236, %v1249
        %v1255 = vadd.f32 %v1237, %v1249
        %v1256 = vadd.f32 %v1238, %v1249
        %1259 = vrot.lane.b32.xlu0 %v1251, 126
        %v1260 = vpop.permute.xlu0 %1259
        %1261 = vrot.lane.b32.xlu0 %v1254, 126
        %v1262 = vpop.permute.xlu0 %1261
        %1265 = vrot.lane.b32.xlu0 %v1251, 124
        %v1266 = vpop.permute.xlu0 %1265
        %1267 = vrot.lane.b32.xlu0 %v1254, 124
        %v1268 = vpop.permute.xlu0 %1267
        %1271 = vrot.lane.b32.xlu0 %v1251, 122
        %v1272 = vpop.permute.xlu0 %1271
        %1273 = vrot.lane.b32.xlu0 %v1254, 122
        %v1274 = vpop.permute.xlu0 %1273
        %1277 = vrot.lane.b32.xlu0 %v1251, 120
        %v1278 = vpop.permute.xlu0 %1277
        %1279 = vrot.lane.b32.xlu0 %v1254, 120
        %v1280 = vpop.permute.xlu0 %1279
        %1283 = vrot.lane.b32.xlu0 %v1251, 118
        %v1284 = vpop.permute.xlu0 %1283
        %1285 = vrot.lane.b32.xlu0 %v1254, 118
        %v1286 = vpop.permute.xlu0 %1285
        %1289 = vrot.lane.b32.xlu0 %v1251, 116
        %v1290 = vpop.permute.xlu0 %1289
        %1291 = vrot.lane.b32.xlu0 %v1254, 116
        %v1292 = vpop.permute.xlu0 %1291
        %1297 = vrot.lane.b32.xlu0 %v1251, 114
        %v1298 = vpop.permute.xlu0 %1297
        %1299 = vrot.lane.b32.xlu0 %v1252, 114
        %v1300 = vpop.permute.xlu0 %1299
        %1301 = vrot.lane.b32.xlu0 %v1254, 114
        %v1302 = vpop.permute.xlu0 %1301
        %1303 = vrot.lane.b32.xlu0 %v1255, 114
        %v1304 = vpop.permute.xlu0 %1303
        %vm1305 = vcmask 932864
        %v1306 = vsel %vm1305, %v1298, %v1300
        %v1307 = vsel %vm1305, %v1302, %v1304
        %1310 = vrot.lane.b32.xlu0 %v1252, 112
        %v1311 = vpop.permute.xlu0 %1310
        %1312 = vrot.lane.b32.xlu0 %v1255, 112
        %v1313 = vpop.permute.xlu0 %1312
        %1316 = vrot.lane.b32.xlu0 %v1252, 110
        %v1317 = vpop.permute.xlu0 %1316
        %1318 = vrot.lane.b32.xlu0 %v1255, 110
        %v1319 = vpop.permute.xlu0 %1318
        %1322 = vrot.lane.b32.xlu0 %v1252, 108
        %v1323 = vpop.permute.xlu0 %1322
        %1324 = vrot.lane.b32.xlu0 %v1255, 108
        %v1325 = vpop.permute.xlu0 %1324
        %1328 = vrot.lane.b32.xlu0 %v1252, 106
        %v1329 = vpop.permute.xlu0 %1328
        %1330 = vrot.lane.b32.xlu0 %v1255, 106
        %v1331 = vpop.permute.xlu0 %1330
        %1334 = vrot.lane.b32.xlu0 %v1252, 104
        %v1335 = vpop.permute.xlu0 %1334
        %1336 = vrot.lane.b32.xlu0 %v1255, 104
        %v1337 = vpop.permute.xlu0 %1336
        %1340 = vrot.lane.b32.xlu0 %v1252, 102
        %v1341 = vpop.permute.xlu0 %1340
        %1342 = vrot.lane.b32.xlu0 %v1255, 102
        %v1343 = vpop.permute.xlu0 %1342
        %1348 = vrot.lane.b32.xlu0 %v1252, 100
        %v1349 = vpop.permute.xlu0 %1348
        %1350 = vrot.lane.b32.xlu0 %v1253, 100
        %v1351 = vpop.permute.xlu0 %1350
        %1352 = vrot.lane.b32.xlu0 %v1255, 100
        %v1353 = vpop.permute.xlu0 %1352
        %1354 = vrot.lane.b32.xlu0 %v1256, 100
        %v1355 = vpop.permute.xlu0 %1354
        %vm1356 = vcmask 818176
        %v1357 = vsel %vm1356, %v1349, %v1351
        %v1358 = vsel %vm1356, %v1353, %v1355
        %1361 = vrot.lane.b32.xlu0 %v1253, 98
        %v1362 = vpop.permute.xlu0 %1361
        %1363 = vrot.lane.b32.xlu0 %v1256, 98
        %v1364 = vpop.permute.xlu0 %1363
        %vm1367 = vcmask 130048
        %v1368 = vsel %vm1367, %v1251, %v1260
        %v1369 = vsel %vm1367, %v1254, %v1262
        %vm1370 = vcmask 261120
        %v1371 = vsel %vm1370, %v1368, %v1266
        %v1372 = vsel %vm1370, %v1369, %v1268
        %vm1373 = vcmask 392192
        %v1374 = vsel %vm1373, %v1371, %v1272
        %v1375 = vsel %vm1373, %v1372, %v1274
        %vm1376 = vcmask 523264
        %v1377 = vsel %vm1376, %v1374, %v1278
        %v1378 = vsel %vm1376, %v1375, %v1280
        %vm1379 = vcmask 654336
        %v1380 = vsel %vm1379, %v1377, %v1284
        %v1381 = vsel %vm1379, %v1378, %v1286
        %vm1382 = vcmask 785408
        %v1383 = vsel %vm1382, %v1380, %v1290
        %v1384 = vsel %vm1382, %v1381, %v1292
        %vm1385 = vcmask 916480
        %v1386 = vsel %vm1385, %v1383, %v1306
        %v1387 = vsel %vm1385, %v1384, %v1307
        %v1388 = vsel %vm1367, %v1311, %v1317
        %v1389 = vsel %vm1367, %v1313, %v1319
        %v1390 = vsel %vm1370, %v1388, %v1323
        %v1391 = vsel %vm1370, %v1389, %v1325
        %v1392 = vsel %vm1373, %v1390, %v1329
        %v1393 = vsel %vm1373, %v1391, %v1331
        %v1394 = vsel %vm1376, %v1392, %v1335
        %v1395 = vsel %vm1376, %v1393, %v1337
        %v1396 = vsel %vm1379, %v1394, %v1341
        %v1397 = vsel %vm1379, %v1395, %v1343
        %v1398 = vsel %vm1382, %v1396, %v1357
        %v1399 = vsel %vm1382, %v1397, %v1358
        %v1400 = vsel %vm1385, %v1398, %v1362
        %v1401 = vsel %vm1385, %v1399, %v1364
        %1402 = vst [vmem:[%s163] sm:$0xff] %v1386
        %1403 = vst [vmem:[%s163 + $0x8] sm:$0xff] %v1400
        %1404 = vst [vmem:[%s163 + $0x10] sm:$0xff] %v1387
        %1405 = vst [vmem:[%s163 + $0x18] sm:$0xff] %v1401
        %s1406 = sand.u32 %s93, 1
        %s1407 = scalar_lea.sflag [#allocation3], %s1406
        %s1408 = sand.u32 %s93, 1
        %s1409 = smul.addr %s1408, 32
        %s1410 = scalar_lea.vmem [#allocation2], %s1409
        // Predicated region
        $region33: #{tpu_custom_call.1} parent=31 // pred_check
          %p1411 = pneg %p103
        $region34: #{tpu_custom_call.1} parent=31 // pred_check_branch
          %1413 = sbr.rel (%p1411) target = $region36
        $region35: #{tpu_custom_call.1} parent=31 // pred_region
          %s1415 = ssub.s32 512, 512
          %1416 = vsyncadd %s1407, %s1415
          %s1417 = smul.addr %s17, 4
          %s1418 = smul.addr %s1417, 128
          %s1419 = scalar_lea.hbm %s3, %s1418
          %s1420 = sshll.u32 %s1410, 4
          %s1421 = int_to_ptr.vmem [resolvable:$true] %s1420
          %1426 = dma.vmem_to_hbm [thread:$0]  %s1421, 512, %s1419, %s1407, 256, 256, 16
        $region36: #{tpu_custom_call.1} parent=31 // pred_fallthru
          _
      $region32: #{tpu_custom_call.1} parent=5 // pred_fallthru
        _
      %p1427 = scmp.le.s32.totalorder 2, %s12
      // Predicated region
      $region37: #{tpu_custom_call.1} parent=5 // pred_check
        %p1428 = pneg %p1427
      $region38: #{tpu_custom_call.1} parent=5 // pred_check_branch
        %1430 = sbr.rel (%p1428) target = $region40
      $region39: #{tpu_custom_call.1} parent=5 // pred_region
        %s1431 = ssub.s32 %s12, 2
        // Predicated region
        $region41: #{tpu_custom_call.1} parent=39 // pred_check
          %p1432 = pneg %p109
        $region42: #{tpu_custom_call.1} parent=39 // pred_check_branch
          %1434 = sbr.rel (%p1432) target = $region44
        $region43: #{tpu_custom_call.1} parent=39 // pred_region
          %s1435 = sand.u32 %s94, 1
          %s1436 = scalar_lea.sflag [#allocation3], %s1435
          %s1437 = sand.u32 %s94, 1
          %s1438 = smul.addr %s1437, 32
          %s1439 = scalar_lea.vmem [#allocation2], %s1438
          %1440 = dma.done %s1436, 512
        $region44: #{tpu_custom_call.1} parent=39 // pred_fallthru
          _
      $region40: #{tpu_custom_call.1} parent=5 // pred_fallthru
        _
    $region6: #{tpu_custom_call.1} parent=1 // loop_footer
      %s16 = sadd.s32 1, %s12
    $region7: #{tpu_custom_call.1} parent=1 // loop_footer_branch
      %11 = sbr.rel target = $region3
    $region8: #{tpu_custom_call.1} parent=1 // loop_exit
      _
    %1441 = vsyncpa [#allocation3], 1
    %s1442 = scalar_lea.sflag [#allocation3], 1
    %1443 = vsyncpa %s1442, 1

</llo_original>
